<compile_context>
chip_gen: v7x
topology: tpu7x:2x2x1
jax: 0.10.0
libtpu: 0.0.40
codegen_flags: <defaults>
</compile_context>

<pallas_src>
import functools
import math

import jax
import jax.numpy as jnp
from jax.experimental import pallas as pl
from jax.experimental.pallas import tpu as pltpu


def _pick_tile(dim, pref, align):
    """Largest tile <= pref that is a multiple of `align` and divides `dim`.

    Falls back to the full dim (always a legal block shape). Keeps blocks
    (8, 128)-friendly while remaining correct for small / unaligned shapes.
    """
    if dim <= pref:
        return dim
    t = (pref // align) * align
    while t >= align:
        if dim % t == 0:
            return t
        t -= align
    return dim


# ------------------------- tiled projection matmul ------------------------- #
def _matmul_kernel(x_ref, w_ref, o_ref, acc_ref):
    @pl.when(pl.program_id(2) == 0)
    def _init():
        acc_ref[...] = jnp.zeros_like(acc_ref)

    acc_ref[...] += jnp.dot(
        x_ref[...], w_ref[...], preferred_element_type=jnp.float32
    )

    @pl.when(pl.program_id(2) == pl.num_programs(2) - 1)
    def _store():
        o_ref[...] = acc_ref[...].astype(o_ref.dtype)


def matmul(x, w, *, tm=256, tn=256, tk=512):
    """x: (M, K) @ w: (K, N) -> (M, N), tiled + pipelined with f32 accumulation.

    w is expected already in (in, out) layout (PyTorch weights transposed once
    at load time, not per call).
    """
    M, K = x.shape
    K2, N = w.shape
    assert K == K2
    tm = _pick_tile(M, tm, 8)
    tn = _pick_tile(N, tn, 128)
    tk = _pick_tile(K, tk, 128)

    return pl.pallas_call(
        _matmul_kernel,
        out_shape=jax.ShapeDtypeStruct((M, N), x.dtype),
        grid_spec=pltpu.PrefetchScalarGridSpec(
            num_scalar_prefetch=0,
            grid=(M // tm, N // tn, K // tk),
            in_specs=[
                pl.BlockSpec((tm, tk), lambda i, j, k: (i, k)),
                pl.BlockSpec((tk, tn), lambda i, j, k: (k, j)),
            ],
            out_specs=pl.BlockSpec((tm, tn), lambda i, j, k: (i, j)),
            scratch_shapes=[pltpu.VMEM((tm, tn), jnp.float32)],
        ),
        compiler_params=pltpu.CompilerParams(
            dimension_semantics=("parallel", "parallel", "arbitrary"),
            vmem_limit_bytes=32 * 1024 * 1024,
        ),
    )(x, w)


# ------------------------- flash causal attention -------------------------- #
def _flash_attn_kernel(q_ref, k_ref, v_ref, o_ref, m_scr, l_scr, acc_scr,
                       *, num_heads, head_dim, scale, block_q, block_kv):
    qi = pl.program_id(1)
    ki = pl.program_id(2)

    @pl.when(ki == 0)
    def _init():
        m_scr[...] = jnp.full_like(m_scr, -jnp.inf)
        l_scr[...] = jnp.zeros_like(l_scr)
        acc_scr[...] = jnp.zeros_like(acc_scr)

    q_start = qi * block_q
    k_start = ki * block_kv

    # Causal block-skip: if every key of this kv block comes after the last
    # query of this q block, the block contributes nothing — skip all compute.
    @pl.when(k_start < q_start + block_q)
    def _compute():
        qb = q_ref[0]                       # (block_q, E)  heads packed in lanes
        kb = k_ref[0]                       # (block_kv, E)
        vb = v_ref[0]                       # (block_kv, E)

        # Per-tile causal mask (only block_q x block_kv iotas, shared by heads).
        row = q_start + jax.lax.broadcasted_iota(
            jnp.int32, (block_q, block_kv), 0)
        col = k_start + jax.lax.broadcasted_iota(
            jnp.int32, (block_q, block_kv), 1)
        causal = col <= row

        for h in range(num_heads):          # static unroll over heads
            lo = h * head_dim
            hi = lo + head_dim
            q_h = qb[:, lo:hi]              # (block_q, D)
            k_h = kb[:, lo:hi]              # (block_kv, D)
            v_h = vb[:, lo:hi]              # (block_kv, D)

            # s[i, j] = sum_d q[i, d] * k[j, d]  — contract on D, no k.T copy.
            s = jax.lax.dot_general(
                q_h, k_h,
                dimension_numbers=(((1,), (1,)), ((), ())),
                preferred_element_type=jnp.float32,
            ) * scale                       # (block_q, block_kv), f32
            s = jnp.where(causal, s, -jnp.inf)

            m_prev = m_scr[h]                                   # (block_q, 1)
            m_new = jnp.maximum(m_prev, jnp.max(s, axis=-1, keepdims=True))
            alpha = jnp.exp(m_prev - m_new)                     # f32
            p = jnp.exp(s - m_new)                              # f32
            l_scr[h] = alpha * l_scr[h] + jnp.sum(p, axis=-1, keepdims=True)
            pv = jax.lax.dot_general(
                p.astype(v_h.dtype), v_h,                       # bf16 MXU if bf16
                dimension_numbers=(((1,), (0,)), ((), ())),
                preferred_element_type=jnp.float32,
            )                                                   # (block_q, D)
            acc_scr[h] = alpha * acc_scr[h] + pv
            m_scr[h] = m_new

    @pl.when(ki == pl.num_programs(2) - 1)
    def _epilogue():
        # One reciprocal per query row per head (epilogue only), then a
        # broadcast multiply — no SxS divide.
        for h in range(num_heads):
            lo = h * head_dim
            hi = lo + head_dim
            inv_l = pl.reciprocal(l_scr[h], approx=False)       # (block_q, 1)
            o_ref[0, :, lo:hi] = (acc_scr[h] * inv_l).astype(o_ref.dtype)


def flash_causal_attention(q, k, v, num_heads, *, block_q=128, block_kv=128):
    """Causal SDPA on token-major tensors.

    q, k, v: (B, S, E) with heads packed along E (head h = columns h*D:(h+1)*D).
    Returns (B, S, E) with the same packing — identical to PyTorch's merged-head
    layout, so no transpose is needed before the output projection.

    VMEM per step ~ 4 * block * E (+ f32 scratch); with the default 128-row
    blocks this stays far under the 32 MiB scoped limit on v5e/v6e/v7x.
    """
    B, S, E = q.shape
    assert E % num_heads == 0
    D = E // num_heads
    scale = 1.0 / math.sqrt(D)
    block_q = _pick_tile(S, block_q, 8)
    block_kv = _pick_tile(S, block_kv, 8)

    kernel = functools.partial(
        _flash_attn_kernel,
        num_heads=num_heads, head_dim=D, scale=scale,
        block_q=block_q, block_kv=block_kv,
    )
    return pl.pallas_call(
        kernel,
        out_shape=jax.ShapeDtypeStruct((B, S, E), q.dtype),
        grid_spec=pltpu.PrefetchScalarGridSpec(
            num_scalar_prefetch=0,
            grid=(B, S // block_q, S // block_kv),
            in_specs=[
                pl.BlockSpec((1, block_q, E), lambda b, qi, ki: (b, qi, 0)),
                pl.BlockSpec((1, block_kv, E), lambda b, qi, ki: (b, ki, 0)),
                pl.BlockSpec((1, block_kv, E), lambda b, qi, ki: (b, ki, 0)),
            ],
            out_specs=pl.BlockSpec((1, block_q, E), lambda b, qi, ki: (b, qi, 0)),
            scratch_shapes=[
                pltpu.VMEM((num_heads, block_q, 1), jnp.float32),   # m
                pltpu.VMEM((num_heads, block_q, 1), jnp.float32),   # l
                pltpu.VMEM((num_heads, block_q, D), jnp.float32),   # acc
            ],
        ),
        compiler_params=pltpu.CompilerParams(
            dimension_semantics=("parallel", "parallel", "arbitrary"),
            vmem_limit_bytes=32 * 1024 * 1024,
        ),
    )(q, k, v)


# ------------------------------ full forward -------------------------------- #
def multi_head_attention(x, w_qkv_t, w_out_t, num_heads):
    """MultiHeadAttention.forward (eval mode, bias=False, dropout=0.0).

    x:        (B, S, E)
    w_qkv_t:  (E, 3E)  qkv_proj.weight pre-transposed to (in, out)
    w_out_t:  (E, E)   out_proj.weight pre-transposed to (in, out)
    """
    B, S, E = x.shape
    qkv = matmul(x.reshape(B * S, E), w_qkv_t).reshape(B, S, 3 * E)
    q, k, v = jnp.split(qkv, 3, axis=2)            # (B,S,E) slices — no transpose
    att = flash_causal_attention(q, k, v, num_heads)   # (B,S,E), heads merged
    out = matmul(att.reshape(B * S, E), w_out_t).reshape(B, S, E)
    return out


# ------------------------------- references --------------------------------- #
def multi_head_attention_ref(x, w_qkv, w_out, num_heads):
    """Pure-JAX reference, PyTorch-convention (out, in) weights."""
    B, S, E = x.shape
    D = E // num_heads
    qkv = x @ w_qkv.T
    q, k, v = jnp.split(qkv, 3, axis=2)

    def heads(t):
        return t.reshape(B, S, num_heads, D).transpose(0, 2, 1, 3)

    q, k, v = heads(q), heads(k), heads(v)
    s = jnp.einsum("bhqd,bhkd->bhqk", q, k) / math.sqrt(D)
    mask = jnp.tril(jnp.ones((S, S), dtype=bool))
    s = jnp.where(mask, s, -jnp.inf)
    p = jax.nn.softmax(s, axis=-1)
    att = jnp.einsum("bhqk,bhkd->bhqd", p, v)
    att = att.transpose(0, 2, 1, 3).reshape(B, S, E)
    return att @ w_out.T


def causal_sdpa_ref(q, k, v, num_heads):
    """Pure-JAX causal SDPA on (B, S, E) tensors with heads packed along E."""
    B, S, E = q.shape
    D = E // num_heads

    def heads(t):
        return t.reshape(B, S, num_heads, D).transpose(0, 2, 1, 3)

    qh, kh, vh = heads(q), heads(k), heads(v)
    s = jnp.einsum("bhqd,bhkd->bhqk", qh, kh) / math.sqrt(D)
    mask = jnp.tril(jnp.ones((S, S), dtype=bool))
    s = jnp.where(mask, s, -jnp.inf)
    p = jax.nn.softmax(s, axis=-1)
    att = jnp.einsum("bhqk,bhkd->bhqd", p, vh)
    return att.transpose(0, 2, 1, 3).reshape(B, S, E)


if __name__ == "__main__":
    B, S, E, H = 2, 8, 32, 4   # batch, seq, embed_dim, num_heads

    key = jax.random.PRNGKey(0)
    kx, kqkv, kout, kq2, kk2, kv2 = jax.random.split(key, 6)

    x = jax.random.normal(kx, (B, S, E), dtype=jnp.float32)
    bound = 1.0 / math.sqrt(E)   # nn.Linear default init: U(-1/sqrt(in), 1/sqrt(in))
    w_qkv = jax.random.uniform(kqkv, (3 * E, E), minval=-bound, maxval=bound,
                               dtype=jnp.float32)
    w_out = jax.random.uniform(kout, (E, E), minval=-bound, maxval=bound,
                               dtype=jnp.float32)

    # Pre-transpose the PyTorch (out, in) weights ONCE, outside the forward.
    w_qkv_t = jnp.asarray(w_qkv.T)
    w_out_t = jnp.asarray(w_out.T)

    fwd = jax.jit(multi_head_attention, static_argnames=("num_heads",))
    out = jax.block_until_ready(fwd(x, w_qkv_t, w_out_t, num_heads=H))

    ref = multi_head_attention_ref(x, w_qkv, w_out, H)
    assert out.shape == (B, S, E)
    assert jnp.allclose(out, ref, atol=1e-4, rtol=1e-4), \
        "mismatch vs reference (full forward)"

    # Second check: multi-block flash path (online softmax across kv blocks,
    # causal block-skip, diagonal-block masking) at S=16 with 8-row blocks.
    S2 = 16
    q2 = jax.random.normal(kq2, (B, S2, E), dtype=jnp.float32)
    k2 = jax.random.normal(kk2, (B, S2, E), dtype=jnp.float32)
    v2 = jax.random.normal(kv2, (B, S2, E), dtype=jnp.float32)
    att = jax.block_until_ready(
        flash_causal_attention(q2, k2, v2, H, block_q=8, block_kv=8))
    att_ref = causal_sdpa_ref(q2, k2, v2, H)
    assert jnp.allclose(att, att_ref, atol=1e-4, rtol=1e-4), \
        "mismatch vs reference (flash attention)"

    print("KERNEL_OK")
</pallas_src>

<mosaic_0001>
module attributes {stable_mosaic.version = 11 : i64} {
  func.func @_matmul_kernel(%arg0: i32, %arg1: i32, %arg2: i32, %arg3: memref<16x32xf32, #tpu.memory_space<vmem>>, %arg4: memref<32x32xf32, #tpu.memory_space<vmem>>, %arg5: memref<16x32xf32, #tpu.memory_space<vmem>>, %arg6: memref<16x32xf32, #tpu.memory_space<vmem>>) attributes {dimension_semantics = [#tpu.dimension_semantics<parallel>, #tpu.dimension_semantics<parallel>, #tpu.dimension_semantics<arbitrary>], iteration_bounds = array<i64: 1, 1, 1>, scalar_prefetch = 0 : i64, scratch_operands = 1 : i64, tpu.core_type = #tpu.core_type<tc>, window_params = [{transform_indices = @transform_0, window_bounds = array<i64: 16, 32>}, {transform_indices = @transform_1, window_bounds = array<i64: 32, 32>}, {transform_indices = @transform_2, window_bounds = array<i64: 16, 32>}]} {
    %c0_i32 = arith.constant 0 : i32
    %0 = arith.cmpi eq, %arg2, %c0_i32 : i32
    %1 = arith.extui %0 : i1 to i32
    %c0_i32_0 = arith.constant 0 : i32
    %2 = arith.cmpi ne, %1, %c0_i32_0 : i32
    scf.if %2 {
      %cst_10 = arith.constant 0.000000e+00 : f32
      %12 = vector.broadcast %cst_10 : f32 to vector<16x32xf32>
      %c0_11 = arith.constant 0 : index
      %c0_12 = arith.constant 0 : index
      %13 = vector.load %arg6[%c0_11, %c0_12] : memref<16x32xf32, #tpu.memory_space<vmem>>, vector<16x32xf32>
      tpu.vector_store %arg6[%c0_11, %c0_12], %12 {strides = array<i32>} : memref<16x32xf32, #tpu.memory_space<vmem>>, vector<16x32xf32>,
    } else {
    }
    %c0 = arith.constant 0 : index
    %c0_1 = arith.constant 0 : index
    %3 = vector.load %arg6[%c0, %c0_1] : memref<16x32xf32, #tpu.memory_space<vmem>>, vector<16x32xf32>
    %c0_2 = arith.constant 0 : index
    %c0_3 = arith.constant 0 : index
    %4 = vector.load %arg3[%c0_2, %c0_3] : memref<16x32xf32, #tpu.memory_space<vmem>>, vector<16x32xf32>
    %c0_4 = arith.constant 0 : index
    %c0_5 = arith.constant 0 : index
    %5 = vector.load %arg4[%c0_4, %c0_5] : memref<32x32xf32, #tpu.memory_space<vmem>>, vector<32x32xf32>
    %cst = arith.constant dense<0.000000e+00> : vector<16x32xf32>
    %6 = tpu.matmul %4, %5, %cst {dimension_numbers = #tpu.dot_dimension_numbers<[1], [0], [0], [1], [0, 0, 1, 1], [], []>} : vector<16x32xf32>, vector<32x32xf32>, vector<16x32xf32> -> vector<16x32xf32>
    %7 = arith.addf %3, %6 : vector<16x32xf32>
    %c0_6 = arith.constant 0 : index
    %c0_7 = arith.constant 0 : index
    %8 = vector.load %arg6[%c0_6, %c0_7] : memref<16x32xf32, #tpu.memory_space<vmem>>, vector<16x32xf32>
    tpu.vector_store %arg6[%c0_6, %c0_7], %7 {strides = array<i32>} : memref<16x32xf32, #tpu.memory_space<vmem>>, vector<16x32xf32>,
    %c0_i32_8 = arith.constant 0 : i32
    %9 = arith.cmpi eq, %arg2, %c0_i32_8 : i32
    %10 = arith.extui %9 : i1 to i32
    %c0_i32_9 = arith.constant 0 : i32
    %11 = arith.cmpi ne, %10, %c0_i32_9 : i32
    scf.if %11 {
      %c0_10 = arith.constant 0 : index
      %c0_11 = arith.constant 0 : index
      %12 = vector.load %arg6[%c0_10, %c0_11] : memref<16x32xf32, #tpu.memory_space<vmem>>, vector<16x32xf32>
      %c0_12 = arith.constant 0 : index
      %c0_13 = arith.constant 0 : index
      %13 = vector.load %arg5[%c0_12, %c0_13] : memref<16x32xf32, #tpu.memory_space<vmem>>, vector<16x32xf32>
      tpu.vector_store %arg5[%c0_12, %c0_13], %12 {strides = array<i32>} : memref<16x32xf32, #tpu.memory_space<vmem>>, vector<16x32xf32>,
    } else {
    }
    return
  }
  func.func @transform_0(%arg0: i32, %arg1: i32, %arg2: i32) -> (i32, i32) {
    %c0_i32 = arith.constant 0 : i32
    return %arg0, %arg2 : i32, i32
  }
  func.func @transform_1(%arg0: i32, %arg1: i32, %arg2: i32) -> (i32, i32) {
    %c0_i32 = arith.constant 0 : i32
    return %arg2, %arg1 : i32, i32
  }
  func.func @transform_2(%arg0: i32, %arg1: i32, %arg2: i32) -> (i32, i32) {
    %c0_i32 = arith.constant 0 : i32
    return %arg0, %arg1 : i32, i32
  }
}

module attributes {stable_mosaic.version = 11 : i64} {
  func.func @_matmul_kernel(%arg0: i32, %arg1: i32, %arg2: i32, %arg3: memref<16x32xf32, #tpu.memory_space<vmem>>, %arg4: memref<32x96xf32, #tpu.memory_space<vmem>>, %arg5: memref<16x96xf32, #tpu.memory_space<vmem>>, %arg6: memref<16x96xf32, #tpu.memory_space<vmem>>) attributes {dimension_semantics = [#tpu.dimension_semantics<parallel>, #tpu.dimension_semantics<parallel>, #tpu.dimension_semantics<arbitrary>], iteration_bounds = array<i64: 1, 1, 1>, scalar_prefetch = 0 : i64, scratch_operands = 1 : i64, tpu.core_type = #tpu.core_type<tc>, window_params = [{transform_indices = @transform_0, window_bounds = array<i64: 16, 32>}, {transform_indices = @transform_1, window_bounds = array<i64: 32, 96>}, {transform_indices = @transform_2, window_bounds = array<i64: 16, 96>}]} {
    %c0_i32 = arith.constant 0 : i32
    %0 = arith.cmpi eq, %arg2, %c0_i32 : i32
    %1 = arith.extui %0 : i1 to i32
    %c0_i32_0 = arith.constant 0 : i32
    %2 = arith.cmpi ne, %1, %c0_i32_0 : i32
    scf.if %2 {
      %cst_10 = arith.constant 0.000000e+00 : f32
      %12 = vector.broadcast %cst_10 : f32 to vector<16x96xf32>
      %c0_11 = arith.constant 0 : index
      %c0_12 = arith.constant 0 : index
      %13 = vector.load %arg6[%c0_11, %c0_12] : memref<16x96xf32, #tpu.memory_space<vmem>>, vector<16x96xf32>
      tpu.vector_store %arg6[%c0_11, %c0_12], %12 {strides = array<i32>} : memref<16x96xf32, #tpu.memory_space<vmem>>, vector<16x96xf32>,
    } else {
    }
    %c0 = arith.constant 0 : index
    %c0_1 = arith.constant 0 : index
    %3 = vector.load %arg6[%c0, %c0_1] : memref<16x96xf32, #tpu.memory_space<vmem>>, vector<16x96xf32>
    %c0_2 = arith.constant 0 : index
    %c0_3 = arith.constant 0 : index
    %4 = vector.load %arg3[%c0_2, %c0_3] : memref<16x32xf32, #tpu.memory_space<vmem>>, vector<16x32xf32>
    %c0_4 = arith.constant 0 : index
    %c0_5 = arith.constant 0 : index
    %5 = vector.load %arg4[%c0_4, %c0_5] : memref<32x96xf32, #tpu.memory_space<vmem>>, vector<32x96xf32>
    %cst = arith.constant dense<0.000000e+00> : vector<16x96xf32>
    %6 = tpu.matmul %4, %5, %cst {dimension_numbers = #tpu.dot_dimension_numbers<[1], [0], [0], [1], [0, 0, 1, 1], [], []>} : vector<16x32xf32>, vector<32x96xf32>, vector<16x96xf32> -> vector<16x96xf32>
    %7 = arith.addf %3, %6 : vector<16x96xf32>
    %c0_6 = arith.constant 0 : index
    %c0_7 = arith.constant 0 : index
    %8 = vector.load %arg6[%c0_6, %c0_7] : memref<16x96xf32, #tpu.memory_space<vmem>>, vector<16x96xf32>
    tpu.vector_store %arg6[%c0_6, %c0_7], %7 {strides = array<i32>} : memref<16x96xf32, #tpu.memory_space<vmem>>, vector<16x96xf32>,
    %c0_i32_8 = arith.constant 0 : i32
    %9 = arith.cmpi eq, %arg2, %c0_i32_8 : i32
    %10 = arith.extui %9 : i1 to i32
    %c0_i32_9 = arith.constant 0 : i32
    %11 = arith.cmpi ne, %10, %c0_i32_9 : i32
    scf.if %11 {
      %c0_10 = arith.constant 0 : index
      %c0_11 = arith.constant 0 : index
      %12 = vector.load %arg6[%c0_10, %c0_11] : memref<16x96xf32, #tpu.memory_space<vmem>>, vector<16x96xf32>
      %c0_12 = arith.constant 0 : index
      %c0_13 = arith.constant 0 : index
      %13 = vector.load %arg5[%c0_12, %c0_13] : memref<16x96xf32, #tpu.memory_space<vmem>>, vector<16x96xf32>
      tpu.vector_store %arg5[%c0_12, %c0_13], %12 {strides = array<i32>} : memref<16x96xf32, #tpu.memory_space<vmem>>, vector<16x96xf32>,
    } else {
    }
    return
  }
  func.func @transform_0(%arg0: i32, %arg1: i32, %arg2: i32) -> (i32, i32) {
    %c0_i32 = arith.constant 0 : i32
    return %arg0, %arg2 : i32, i32
  }
  func.func @transform_1(%arg0: i32, %arg1: i32, %arg2: i32) -> (i32, i32) {
    %c0_i32 = arith.constant 0 : i32
    return %arg2, %arg1 : i32, i32
  }
  func.func @transform_2(%arg0: i32, %arg1: i32, %arg2: i32) -> (i32, i32) {
    %c0_i32 = arith.constant 0 : i32
    return %arg0, %arg1 : i32, i32
  }
}

module attributes {stable_mosaic.version = 11 : i64} {
  func.func @_flash_attn_kernel(%arg0: i32, %arg1: i32, %arg2: i32, %arg3: memref<1x8x32xf32, #tpu.memory_space<vmem>>, %arg4: memref<1x8x32xf32, #tpu.memory_space<vmem>>, %arg5: memref<1x8x32xf32, #tpu.memory_space<vmem>>, %arg6: memref<1x8x32xf32, #tpu.memory_space<vmem>>, %arg7: memref<4x8x1xf32, #tpu.memory_space<vmem>>, %arg8: memref<4x8x1xf32, #tpu.memory_space<vmem>>, %arg9: memref<4x8x8xf32, #tpu.memory_space<vmem>>) attributes {dimension_semantics = [#tpu.dimension_semantics<parallel>, #tpu.dimension_semantics<parallel>, #tpu.dimension_semantics<arbitrary>], iteration_bounds = array<i64: 2, 1, 1>, scalar_prefetch = 0 : i64, scratch_operands = 3 : i64, tpu.core_type = #tpu.core_type<tc>, window_params = [{transform_indices = @transform_0, window_bounds = array<i64: 1, 8, 32>}, {transform_indices = @transform_1, window_bounds = array<i64: 1, 8, 32>}, {transform_indices = @transform_2, window_bounds = array<i64: 1, 8, 32>}, {transform_indices = @transform_3, window_bounds = array<i64: 1, 8, 32>}]} {
    %c0_i32 = arith.constant 0 : i32
    %0 = arith.cmpi eq, %arg2, %c0_i32 : i32
    %1 = arith.extui %0 : i1 to i32
    %c0_i32_0 = arith.constant 0 : i32
    %2 = arith.cmpi ne, %1, %c0_i32_0 : i32
    scf.if %2 {
      %cst = arith.constant 0xFF800000 : f32
      %12 = vector.broadcast %cst : f32 to vector<4x8x1xf32>
      %c0 = arith.constant 0 : index
      %c0_6 = arith.constant 0 : index
      %c0_7 = arith.constant 0 : index
      %13 = vector.load %arg7[%c0, %c0_6, %c0_7] : memref<4x8x1xf32, #tpu.memory_space<vmem>>, vector<4x8x1xf32>
      tpu.vector_store %arg7[%c0, %c0_6, %c0_7], %12 {strides = array<i32>} : memref<4x8x1xf32, #tpu.memory_space<vmem>>, vector<4x8x1xf32>,
      %cst_8 = arith.constant 0.000000e+00 : f32
      %14 = vector.broadcast %cst_8 : f32 to vector<4x8x1xf32>
      %c0_9 = arith.constant 0 : index
      %c0_10 = arith.constant 0 : index
      %c0_11 = arith.constant 0 : index
      %15 = vector.load %arg8[%c0_9, %c0_10, %c0_11] : memref<4x8x1xf32, #tpu.memory_space<vmem>>, vector<4x8x1xf32>
      tpu.vector_store %arg8[%c0_9, %c0_10, %c0_11], %14 {strides = array<i32>} : memref<4x8x1xf32, #tpu.memory_space<vmem>>, vector<4x8x1xf32>,
      %cst_12 = arith.constant 0.000000e+00 : f32
      %16 = vector.broadcast %cst_12 : f32 to vector<4x8x8xf32>
      %c0_13 = arith.constant 0 : index
      %c0_14 = arith.constant 0 : index
      %c0_15 = arith.constant 0 : index
      %17 = vector.load %arg9[%c0_13, %c0_14, %c0_15] : memref<4x8x8xf32, #tpu.memory_space<vmem>>, vector<4x8x8xf32>
      tpu.vector_store %arg9[%c0_13, %c0_14, %c0_15], %16 {strides = array<i32>} : memref<4x8x8xf32, #tpu.memory_space<vmem>>, vector<4x8x8xf32>,
    } else {
    }
    %c8_i32 = arith.constant 8 : i32
    %3 = arith.muli %arg1, %c8_i32 : i32
    %c8_i32_1 = arith.constant 8 : i32
    %4 = arith.muli %arg2, %c8_i32_1 : i32
    %c8_i32_2 = arith.constant 8 : i32
    %5 = arith.addi %3, %c8_i32_2 : i32
    %6 = arith.cmpi slt, %4, %5 : i32
    %7 = arith.extui %6 : i1 to i32
    %c0_i32_3 = arith.constant 0 : i32
    %8 = arith.cmpi ne, %7, %c0_i32_3 : i32
    scf.if %8 {
      %c0 = arith.constant 0 : index
      %c0_6 = arith.constant 0 : index
      %c0_7 = arith.constant 0 : index
      %12 = vector.load %arg3[%c0, %c0_6, %c0_7] : memref<1x8x32xf32, #tpu.memory_space<vmem>>, vector<1x8x32xf32>
      %13 = vector.shape_cast %12 : vector<1x8x32xf32> to vector<8x32xf32>
      %c0_8 = arith.constant 0 : index
      %c0_9 = arith.constant 0 : index
      %c0_10 = arith.constant 0 : index
      %14 = vector.load %arg4[%c0_8, %c0_9, %c0_10] : memref<1x8x32xf32, #tpu.memory_space<vmem>>, vector<1x8x32xf32>
      %15 = vector.shape_cast %14 : vector<1x8x32xf32> to vector<8x32xf32>
      %c0_11 = arith.constant 0 : index
      %c0_12 = arith.constant 0 : index
      %c0_13 = arith.constant 0 : index
      %16 = vector.load %arg5[%c0_11, %c0_12, %c0_13] : memref<1x8x32xf32, #tpu.memory_space<vmem>>, vector<1x8x32xf32>
      %17 = vector.shape_cast %16 : vector<1x8x32xf32> to vector<8x32xf32>
      %18 = tpu.iota {dimensions = array<i32: 0>} : vector<8x8xi32>
      %19 = vector.broadcast %3 : i32 to vector<8x8xi32>
      %20 = arith.addi %19, %18 : vector<8x8xi32>
      %21 = tpu.iota {dimensions = array<i32: 1>} : vector<8x8xi32>
      %22 = vector.broadcast %4 : i32 to vector<8x8xi32>
      %23 = arith.addi %22, %21 : vector<8x8xi32>
      %24 = arith.cmpi sle, %23, %20 : vector<8x8xi32>
      %25 = vector.extract_strided_slice %13 {offsets = [0, 0], sizes = [8, 8], strides = [1, 1]} : vector<8x32xf32> to vector<8x8xf32>
      %26 = vector.extract_strided_slice %15 {offsets = [0, 0], sizes = [8, 8], strides = [1, 1]} : vector<8x32xf32> to vector<8x8xf32>
      %27 = vector.extract_strided_slice %17 {offsets = [0, 0], sizes = [8, 8], strides = [1, 1]} : vector<8x32xf32> to vector<8x8xf32>
      %cst = arith.constant dense<0.000000e+00> : vector<8x8xf32>
      %28 = tpu.matmul %25, %26, %cst {dimension_numbers = #tpu.dot_dimension_numbers<[1], [1], [0], [0], [0, 0, 1, 0], [], []>} : vector<8x8xf32>, vector<8x8xf32>, vector<8x8xf32> -> vector<8x8xf32>
      %cst_14 = arith.constant 0.353553385 : f32
      %29 = vector.broadcast %cst_14 : f32 to vector<8x8xf32>
      %30 = arith.mulf %28, %29 : vector<8x8xf32>
      %cst_15 = arith.constant 0xFF800000 : f32
      %31 = vector.broadcast %cst_15 : f32 to vector<8x8xf32>
      %32 = arith.select %24, %30, %31 : vector<8x8xi1>, vector<8x8xf32>
      %c0_16 = arith.constant 0 : index
      %c0_17 = arith.constant 0 : index
      %c0_18 = arith.constant 0 : index
      %33 = vector.load %arg7[%c0_16, %c0_17, %c0_18] : memref<4x8x1xf32, #tpu.memory_space<vmem>>, vector<1x8x1xf32>
      %34 = vector.shape_cast %33 : vector<1x8x1xf32> to vector<8x1xf32>
      %cst_19 = arith.constant dense<0xFF800000> : vector<8xf32>
      %35 = vector.multi_reduction <maximumf>, %32, %cst_19 [1] : vector<8x8xf32> to vector<8xf32>
      %36 = vector.shape_cast %35 : vector<8xf32> to vector<8x1xf32>
      %37 = arith.maximumf %34, %36 : vector<8x1xf32>
      %38 = arith.subf %34, %37 : vector<8x1xf32>
      %39 = math.exp %38 : vector<8x1xf32>
      %40 = vector.broadcast %37 : vector<8x1xf32> to vector<8x8xf32>
      %41 = arith.subf %32, %40 : vector<8x8xf32>
      %42 = math.exp %41 : vector<8x8xf32>
      %c0_20 = arith.constant 0 : index
      %c0_21 = arith.constant 0 : index
      %c0_22 = arith.constant 0 : index
      %43 = vector.load %arg8[%c0_20, %c0_21, %c0_22] : memref<4x8x1xf32, #tpu.memory_space<vmem>>, vector<1x8x1xf32>
      %44 = vector.shape_cast %43 : vector<1x8x1xf32> to vector<8x1xf32>
      %45 = arith.mulf %39, %44 : vector<8x1xf32>
      %cst_23 = arith.constant dense<0.000000e+00> : vector<8xf32>
      %46 = vector.multi_reduction <add>, %42, %cst_23 [1] : vector<8x8xf32> to vector<8xf32>
      %47 = vector.shape_cast %46 : vector<8xf32> to vector<8x1xf32>
      %48 = arith.addf %45, %47 : vector<8x1xf32>
      %c0_24 = arith.constant 0 : index
      %c0_25 = arith.constant 0 : index
      %c0_26 = arith.constant 0 : index
      %49 = vector.load %arg8[%c0_24, %c0_25, %c0_26] : memref<4x8x1xf32, #tpu.memory_space<vmem>>, vector<1x8x1xf32>
      %50 = vector.shape_cast %49 : vector<1x8x1xf32> to vector<8x1xf32>
      %51 = vector.shape_cast %48 : vector<8x1xf32> to vector<1x8x1xf32>
      tpu.vector_store %arg8[%c0_24, %c0_25, %c0_26], %51 {strides = array<i32>} : memref<4x8x1xf32, #tpu.memory_space<vmem>>, vector<1x8x1xf32>,
      %cst_27 = arith.constant dense<0.000000e+00> : vector<8x8xf32>
      %52 = tpu.matmul %42, %27, %cst_27 {dimension_numbers = #tpu.dot_dimension_numbers<[1], [0], [0], [1], [0, 0, 1, 1], [], []>} : vector<8x8xf32>, vector<8x8xf32>, vector<8x8xf32> -> vector<8x8xf32>
      %c0_28 = arith.constant 0 : index
      %c0_29 = arith.constant 0 : index
      %c0_30 = arith.constant 0 : index
      %53 = vector.load %arg9[%c0_28, %c0_29, %c0_30] : memref<4x8x8xf32, #tpu.memory_space<vmem>>, vector<1x8x8xf32>
      %54 = vector.shape_cast %53 : vector<1x8x8xf32> to vector<8x8xf32>
      %55 = vector.broadcast %39 : vector<8x1xf32> to vector<8x8xf32>
      %56 = arith.mulf %55, %54 : vector<8x8xf32>
      %57 = arith.addf %56, %52 : vector<8x8xf32>
      %c0_31 = arith.constant 0 : index
      %c0_32 = arith.constant 0 : index
      %c0_33 = arith.constant 0 : index
      %58 = vector.load %arg9[%c0_31, %c0_32, %c0_33] : memref<4x8x8xf32, #tpu.memory_space<vmem>>, vector<1x8x8xf32>
      %59 = vector.shape_cast %58 : vector<1x8x8xf32> to vector<8x8xf32>
      %60 = vector.shape_cast %57 : vector<8x8xf32> to vector<1x8x8xf32>
      tpu.vector_store %arg9[%c0_31, %c0_32, %c0_33], %60 {strides = array<i32>} : memref<4x8x8xf32, #tpu.memory_space<vmem>>, vector<1x8x8xf32>,
      %c0_34 = arith.constant 0 : index
      %c0_35 = arith.constant 0 : index
      %c0_36 = arith.constant 0 : index
      %61 = vector.load %arg7[%c0_34, %c0_35, %c0_36] : memref<4x8x1xf32, #tpu.memory_space<vmem>>, vector<1x8x1xf32>
      %62 = vector.shape_cast %61 : vector<1x8x1xf32> to vector<8x1xf32>
      %63 = vector.shape_cast %37 : vector<8x1xf32> to vector<1x8x1xf32>
      tpu.vector_store %arg7[%c0_34, %c0_35, %c0_36], %63 {strides = array<i32>} : memref<4x8x1xf32, #tpu.memory_space<vmem>>, vector<1x8x1xf32>,
      %64 = vector.extract_strided_slice %13 {offsets = [0, 8], sizes = [8, 8], strides = [1, 1]} : vector<8x32xf32> to vector<8x8xf32>
      %65 = vector.extract_strided_slice %15 {offsets = [0, 8], sizes = [8, 8], strides = [1, 1]} : vector<8x32xf32> to vector<8x8xf32>
      %66 = vector.extract_strided_slice %17 {offsets = [0, 8], sizes = [8, 8], strides = [1, 1]} : vector<8x32xf32> to vector<8x8xf32>
      %cst_37 = arith.constant dense<0.000000e+00> : vector<8x8xf32>
      %67 = tpu.matmul %64, %65, %cst_37 {dimension_numbers = #tpu.dot_dimension_numbers<[1], [1], [0], [0], [0, 0, 1, 0], [], []>} : vector<8x8xf32>, vector<8x8xf32>, vector<8x8xf32> -> vector<8x8xf32>
      %cst_38 = arith.constant 0.353553385 : f32
      %68 = vector.broadcast %cst_38 : f32 to vector<8x8xf32>
      %69 = arith.mulf %67, %68 : vector<8x8xf32>
      %cst_39 = arith.constant 0xFF800000 : f32
      %70 = vector.broadcast %cst_39 : f32 to vector<8x8xf32>
      %71 = arith.select %24, %69, %70 : vector<8x8xi1>, vector<8x8xf32>
      %c1 = arith.constant 1 : index
      %c0_40 = arith.constant 0 : index
      %c0_41 = arith.constant 0 : index
      %72 = vector.load %arg7[%c1, %c0_40, %c0_41] : memref<4x8x1xf32, #tpu.memory_space<vmem>>, vector<1x8x1xf32>
      %73 = vector.shape_cast %72 : vector<1x8x1xf32> to vector<8x1xf32>
      %cst_42 = arith.constant dense<0xFF800000> : vector<8xf32>
      %74 = vector.multi_reduction <maximumf>, %71, %cst_42 [1] : vector<8x8xf32> to vector<8xf32>
      %75 = vector.shape_cast %74 : vector<8xf32> to vector<8x1xf32>
      %76 = arith.maximumf %73, %75 : vector<8x1xf32>
      %77 = arith.subf %73, %76 : vector<8x1xf32>
      %78 = math.exp %77 : vector<8x1xf32>
      %79 = vector.broadcast %76 : vector<8x1xf32> to vector<8x8xf32>
      %80 = arith.subf %71, %79 : vector<8x8xf32>
      %81 = math.exp %80 : vector<8x8xf32>
      %c1_43 = arith.constant 1 : index
      %c0_44 = arith.constant 0 : index
      %c0_45 = arith.constant 0 : index
      %82 = vector.load %arg8[%c1_43, %c0_44, %c0_45] : memref<4x8x1xf32, #tpu.memory_space<vmem>>, vector<1x8x1xf32>
      %83 = vector.shape_cast %82 : vector<1x8x1xf32> to vector<8x1xf32>
      %84 = arith.mulf %78, %83 : vector<8x1xf32>
      %cst_46 = arith.constant dense<0.000000e+00> : vector<8xf32>
      %85 = vector.multi_reduction <add>, %81, %cst_46 [1] : vector<8x8xf32> to vector<8xf32>
      %86 = vector.shape_cast %85 : vector<8xf32> to vector<8x1xf32>
      %87 = arith.addf %84, %86 : vector<8x1xf32>
      %c1_47 = arith.constant 1 : index
      %c0_48 = arith.constant 0 : index
      %c0_49 = arith.constant 0 : index
      %88 = vector.load %arg8[%c1_47, %c0_48, %c0_49] : memref<4x8x1xf32, #tpu.memory_space<vmem>>, vector<1x8x1xf32>
      %89 = vector.shape_cast %88 : vector<1x8x1xf32> to vector<8x1xf32>
      %90 = vector.shape_cast %87 : vector<8x1xf32> to vector<1x8x1xf32>
      tpu.vector_store %arg8[%c1_47, %c0_48, %c0_49], %90 {strides = array<i32>} : memref<4x8x1xf32, #tpu.memory_space<vmem>>, vector<1x8x1xf32>,
      %cst_50 = arith.constant dense<0.000000e+00> : vector<8x8xf32>
      %91 = tpu.matmul %81, %66, %cst_50 {dimension_numbers = #tpu.dot_dimension_numbers<[1], [0], [0], [1], [0, 0, 1, 1], [], []>} : vector<8x8xf32>, vector<8x8xf32>, vector<8x8xf32> -> vector<8x8xf32>
      %c1_51 = arith.constant 1 : index
      %c0_52 = arith.constant 0 : index
      %c0_53 = arith.constant 0 : index
      %92 = vector.load %arg9[%c1_51, %c0_52, %c0_53] : memref<4x8x8xf32, #tpu.memory_space<vmem>>, vector<1x8x8xf32>
      %93 = vector.shape_cast %92 : vector<1x8x8xf32> to vector<8x8xf32>
      %94 = vector.broadcast %78 : vector<8x1xf32> to vector<8x8xf32>
      %95 = arith.mulf %94, %93 : vector<8x8xf32>
      %96 = arith.addf %95, %91 : vector<8x8xf32>
      %c1_54 = arith.constant 1 : index
      %c0_55 = arith.constant 0 : index
      %c0_56 = arith.constant 0 : index
      %97 = vector.load %arg9[%c1_54, %c0_55, %c0_56] : memref<4x8x8xf32, #tpu.memory_space<vmem>>, vector<1x8x8xf32>
      %98 = vector.shape_cast %97 : vector<1x8x8xf32> to vector<8x8xf32>
      %99 = vector.shape_cast %96 : vector<8x8xf32> to vector<1x8x8xf32>
      tpu.vector_store %arg9[%c1_54, %c0_55, %c0_56], %99 {strides = array<i32>} : memref<4x8x8xf32, #tpu.memory_space<vmem>>, vector<1x8x8xf32>,
      %c1_57 = arith.constant 1 : index
      %c0_58 = arith.constant 0 : index
      %c0_59 = arith.constant 0 : index
      %100 = vector.load %arg7[%c1_57, %c0_58, %c0_59] : memref<4x8x1xf32, #tpu.memory_space<vmem>>, vector<1x8x1xf32>
      %101 = vector.shape_cast %100 : vector<1x8x1xf32> to vector<8x1xf32>
      %102 = vector.shape_cast %76 : vector<8x1xf32> to vector<1x8x1xf32>
      tpu.vector_store %arg7[%c1_57, %c0_58, %c0_59], %102 {strides = array<i32>} : memref<4x8x1xf32, #tpu.memory_space<vmem>>, vector<1x8x1xf32>,
      %103 = vector.extract_strided_slice %13 {offsets = [0, 16], sizes = [8, 8], strides = [1, 1]} : vector<8x32xf32> to vector<8x8xf32>
      %104 = vector.extract_strided_slice %15 {offsets = [0, 16], sizes = [8, 8], strides = [1, 1]} : vector<8x32xf32> to vector<8x8xf32>
      %105 = vector.extract_strided_slice %17 {offsets = [0, 16], sizes = [8, 8], strides = [1, 1]} : vector<8x32xf32> to vector<8x8xf32>
      %cst_60 = arith.constant dense<0.000000e+00> : vector<8x8xf32>
      %106 = tpu.matmul %103, %104, %cst_60 {dimension_numbers = #tpu.dot_dimension_numbers<[1], [1], [0], [0], [0, 0, 1, 0], [], []>} : vector<8x8xf32>, vector<8x8xf32>, vector<8x8xf32> -> vector<8x8xf32>
      %cst_61 = arith.constant 0.353553385 : f32
      %107 = vector.broadcast %cst_61 : f32 to vector<8x8xf32>
      %108 = arith.mulf %106, %107 : vector<8x8xf32>
      %cst_62 = arith.constant 0xFF800000 : f32
      %109 = vector.broadcast %cst_62 : f32 to vector<8x8xf32>
      %110 = arith.select %24, %108, %109 : vector<8x8xi1>, vector<8x8xf32>
      %c2 = arith.constant 2 : index
      %c0_63 = arith.constant 0 : index
      %c0_64 = arith.constant 0 : index
      %111 = vector.load %arg7[%c2, %c0_63, %c0_64] : memref<4x8x1xf32, #tpu.memory_space<vmem>>, vector<1x8x1xf32>
      %112 = vector.shape_cast %111 : vector<1x8x1xf32> to vector<8x1xf32>
      %cst_65 = arith.constant dense<0xFF800000> : vector<8xf32>
      %113 = vector.multi_reduction <maximumf>, %110, %cst_65 [1] : vector<8x8xf32> to vector<8xf32>
      %114 = vector.shape_cast %113 : vector<8xf32> to vector<8x1xf32>
      %115 = arith.maximumf %112, %114 : vector<8x1xf32>
      %116 = arith.subf %112, %115 : vector<8x1xf32>
      %117 = math.exp %116 : vector<8x1xf32>
      %118 = vector.broadcast %115 : vector<8x1xf32> to vector<8x8xf32>
      %119 = arith.subf %110, %118 : vector<8x8xf32>
      %120 = math.exp %119 : vector<8x8xf32>
      %c2_66 = arith.constant 2 : index
      %c0_67 = arith.constant 0 : index
      %c0_68 = arith.constant 0 : index
      %121 = vector.load %arg8[%c2_66, %c0_67, %c0_68] : memref<4x8x1xf32, #tpu.memory_space<vmem>>, vector<1x8x1xf32>
      %122 = vector.shape_cast %121 : vector<1x8x1xf32> to vector<8x1xf32>
      %123 = arith.mulf %117, %122 : vector<8x1xf32>
      %cst_69 = arith.constant dense<0.000000e+00> : vector<8xf32>
      %124 = vector.multi_reduction <add>, %120, %cst_69 [1] : vector<8x8xf32> to vector<8xf32>
      %125 = vector.shape_cast %124 : vector<8xf32> to vector<8x1xf32>
      %126 = arith.addf %123, %125 : vector<8x1xf32>
      %c2_70 = arith.constant 2 : index
      %c0_71 = arith.constant 0 : index
      %c0_72 = arith.constant 0 : index
      %127 = vector.load %arg8[%c2_70, %c0_71, %c0_72] : memref<4x8x1xf32, #tpu.memory_space<vmem>>, vector<1x8x1xf32>
      %128 = vector.shape_cast %127 : vector<1x8x1xf32> to vector<8x1xf32>
      %129 = vector.shape_cast %126 : vector<8x1xf32> to vector<1x8x1xf32>
      tpu.vector_store %arg8[%c2_70, %c0_71, %c0_72], %129 {strides = array<i32>} : memref<4x8x1xf32, #tpu.memory_space<vmem>>, vector<1x8x1xf32>,
      %cst_73 = arith.constant dense<0.000000e+00> : vector<8x8xf32>
      %130 = tpu.matmul %120, %105, %cst_73 {dimension_numbers = #tpu.dot_dimension_numbers<[1], [0], [0], [1], [0, 0, 1, 1], [], []>} : vector<8x8xf32>, vector<8x8xf32>, vector<8x8xf32> -> vector<8x8xf32>
      %c2_74 = arith.constant 2 : index
      %c0_75 = arith.constant 0 : index
      %c0_76 = arith.constant 0 : index
      %131 = vector.load %arg9[%c2_74, %c0_75, %c0_76] : memref<4x8x8xf32, #tpu.memory_space<vmem>>, vector<1x8x8xf32>
      %132 = vector.shape_cast %131 : vector<1x8x8xf32> to vector<8x8xf32>
      %133 = vector.broadcast %117 : vector<8x1xf32> to vector<8x8xf32>
      %134 = arith.mulf %133, %132 : vector<8x8xf32>
      %135 = arith.addf %134, %130 : vector<8x8xf32>
      %c2_77 = arith.constant 2 : index
      %c0_78 = arith.constant 0 : index
      %c0_79 = arith.constant 0 : index
      %136 = vector.load %arg9[%c2_77, %c0_78, %c0_79] : memref<4x8x8xf32, #tpu.memory_space<vmem>>, vector<1x8x8xf32>
      %137 = vector.shape_cast %136 : vector<1x8x8xf32> to vector<8x8xf32>
      %138 = vector.shape_cast %135 : vector<8x8xf32> to vector<1x8x8xf32>
      tpu.vector_store %arg9[%c2_77, %c0_78, %c0_79], %138 {strides = array<i32>} : memref<4x8x8xf32, #tpu.memory_space<vmem>>, vector<1x8x8xf32>,
      %c2_80 = arith.constant 2 : index
      %c0_81 = arith.constant 0 : index
      %c0_82 = arith.constant 0 : index
      %139 = vector.load %arg7[%c2_80, %c0_81, %c0_82] : memref<4x8x1xf32, #tpu.memory_space<vmem>>, vector<1x8x1xf32>
      %140 = vector.shape_cast %139 : vector<1x8x1xf32> to vector<8x1xf32>
      %141 = vector.shape_cast %115 : vector<8x1xf32> to vector<1x8x1xf32>
      tpu.vector_store %arg7[%c2_80, %c0_81, %c0_82], %141 {strides = array<i32>} : memref<4x8x1xf32, #tpu.memory_space<vmem>>, vector<1x8x1xf32>,
      %142 = vector.extract_strided_slice %13 {offsets = [0, 24], sizes = [8, 8], strides = [1, 1]} : vector<8x32xf32> to vector<8x8xf32>
      %143 = vector.extract_strided_slice %15 {offsets = [0, 24], sizes = [8, 8], strides = [1, 1]} : vector<8x32xf32> to vector<8x8xf32>
      %144 = vector.extract_strided_slice %17 {offsets = [0, 24], sizes = [8, 8], strides = [1, 1]} : vector<8x32xf32> to vector<8x8xf32>
      %cst_83 = arith.constant dense<0.000000e+00> : vector<8x8xf32>
      %145 = tpu.matmul %142, %143, %cst_83 {dimension_numbers = #tpu.dot_dimension_numbers<[1], [1], [0], [0], [0, 0, 1, 0], [], []>} : vector<8x8xf32>, vector<8x8xf32>, vector<8x8xf32> -> vector<8x8xf32>
      %cst_84 = arith.constant 0.353553385 : f32
      %146 = vector.broadcast %cst_84 : f32 to vector<8x8xf32>
      %147 = arith.mulf %145, %146 : vector<8x8xf32>
      %cst_85 = arith.constant 0xFF800000 : f32
      %148 = vector.broadcast %cst_85 : f32 to vector<8x8xf32>
      %149 = arith.select %24, %147, %148 : vector<8x8xi1>, vector<8x8xf32>
      %c3 = arith.constant 3 : index
      %c0_86 = arith.constant 0 : index
      %c0_87 = arith.constant 0 : index
      %150 = vector.load %arg7[%c3, %c0_86, %c0_87] : memref<4x8x1xf32, #tpu.memory_space<vmem>>, vector<1x8x1xf32>
      %151 = vector.shape_cast %150 : vector<1x8x1xf32> to vector<8x1xf32>
      %cst_88 = arith.constant dense<0xFF800000> : vector<8xf32>
      %152 = vector.multi_reduction <maximumf>, %149, %cst_88 [1] : vector<8x8xf32> to vector<8xf32>
      %153 = vector.shape_cast %152 : vector<8xf32> to vector<8x1xf32>
      %154 = arith.maximumf %151, %153 : vector<8x1xf32>
      %155 = arith.subf %151, %154 : vector<8x1xf32>
      %156 = math.exp %155 : vector<8x1xf32>
      %157 = vector.broadcast %154 : vector<8x1xf32> to vector<8x8xf32>
      %158 = arith.subf %149, %157 : vector<8x8xf32>
      %159 = math.exp %158 : vector<8x8xf32>
      %c3_89 = arith.constant 3 : index
      %c0_90 = arith.constant 0 : index
      %c0_91 = arith.constant 0 : index
      %160 = vector.load %arg8[%c3_89, %c0_90, %c0_91] : memref<4x8x1xf32, #tpu.memory_space<vmem>>, vector<1x8x1xf32>
      %161 = vector.shape_cast %160 : vector<1x8x1xf32> to vector<8x1xf32>
      %162 = arith.mulf %156, %161 : vector<8x1xf32>
      %cst_92 = arith.constant dense<0.000000e+00> : vector<8xf32>
      %163 = vector.multi_reduction <add>, %159, %cst_92 [1] : vector<8x8xf32> to vector<8xf32>
      %164 = vector.shape_cast %163 : vector<8xf32> to vector<8x1xf32>
      %165 = arith.addf %162, %164 : vector<8x1xf32>
      %c3_93 = arith.constant 3 : index
      %c0_94 = arith.constant 0 : index
      %c0_95 = arith.constant 0 : index
      %166 = vector.load %arg8[%c3_93, %c0_94, %c0_95] : memref<4x8x1xf32, #tpu.memory_space<vmem>>, vector<1x8x1xf32>
      %167 = vector.shape_cast %166 : vector<1x8x1xf32> to vector<8x1xf32>
      %168 = vector.shape_cast %165 : vector<8x1xf32> to vector<1x8x1xf32>
      tpu.vector_store %arg8[%c3_93, %c0_94, %c0_95], %168 {strides = array<i32>} : memref<4x8x1xf32, #tpu.memory_space<vmem>>, vector<1x8x1xf32>,
      %cst_96 = arith.constant dense<0.000000e+00> : vector<8x8xf32>
      %169 = tpu.matmul %159, %144, %cst_96 {dimension_numbers = #tpu.dot_dimension_numbers<[1], [0], [0], [1], [0, 0, 1, 1], [], []>} : vector<8x8xf32>, vector<8x8xf32>, vector<8x8xf32> -> vector<8x8xf32>
      %c3_97 = arith.constant 3 : index
      %c0_98 = arith.constant 0 : index
      %c0_99 = arith.constant 0 : index
      %170 = vector.load %arg9[%c3_97, %c0_98, %c0_99] : memref<4x8x8xf32, #tpu.memory_space<vmem>>, vector<1x8x8xf32>
      %171 = vector.shape_cast %170 : vector<1x8x8xf32> to vector<8x8xf32>
      %172 = vector.broadcast %156 : vector<8x1xf32> to vector<8x8xf32>
      %173 = arith.mulf %172, %171 : vector<8x8xf32>
      %174 = arith.addf %173, %169 : vector<8x8xf32>
      %c3_100 = arith.constant 3 : index
      %c0_101 = arith.constant 0 : index
      %c0_102 = arith.constant 0 : index
      %175 = vector.load %arg9[%c3_100, %c0_101, %c0_102] : memref<4x8x8xf32, #tpu.memory_space<vmem>>, vector<1x8x8xf32>
      %176 = vector.shape_cast %175 : vector<1x8x8xf32> to vector<8x8xf32>
      %177 = vector.shape_cast %174 : vector<8x8xf32> to vector<1x8x8xf32>
      tpu.vector_store %arg9[%c3_100, %c0_101, %c0_102], %177 {strides = array<i32>} : memref<4x8x8xf32, #tpu.memory_space<vmem>>, vector<1x8x8xf32>,
      %c3_103 = arith.constant 3 : index
      %c0_104 = arith.constant 0 : index
      %c0_105 = arith.constant 0 : index
      %178 = vector.load %arg7[%c3_103, %c0_104, %c0_105] : memref<4x8x1xf32, #tpu.memory_space<vmem>>, vector<1x8x1xf32>
      %179 = vector.shape_cast %178 : vector<1x8x1xf32> to vector<8x1xf32>
      %180 = vector.shape_cast %154 : vector<8x1xf32> to vector<1x8x1xf32>
      tpu.vector_store %arg7[%c3_103, %c0_104, %c0_105], %180 {strides = array<i32>} : memref<4x8x1xf32, #tpu.memory_space<vmem>>, vector<1x8x1xf32>,
    } else {
    }
    %c0_i32_4 = arith.constant 0 : i32
    %9 = arith.cmpi eq, %arg2, %c0_i32_4 : i32
    %10 = arith.extui %9 : i1 to i32
    %c0_i32_5 = arith.constant 0 : i32
    %11 = arith.cmpi ne, %10, %c0_i32_5 : i32
    scf.if %11 {
      %c0 = arith.constant 0 : index
      %c0_6 = arith.constant 0 : index
      %c0_7 = arith.constant 0 : index
      %12 = vector.load %arg8[%c0, %c0_6, %c0_7] : memref<4x8x1xf32, #tpu.memory_space<vmem>>, vector<1x8x1xf32>
      %13 = vector.shape_cast %12 : vector<1x8x1xf32> to vector<8x1xf32>
      %14 = tpu.reciprocal %13 : vector<8x1xf32> -> vector<8x1xf32>
      %c0_8 = arith.constant 0 : index
      %c0_9 = arith.constant 0 : index
      %c0_10 = arith.constant 0 : index
      %15 = vector.load %arg9[%c0_8, %c0_9, %c0_10] : memref<4x8x8xf32, #tpu.memory_space<vmem>>, vector<1x8x8xf32>
      %16 = vector.shape_cast %15 : vector<1x8x8xf32> to vector<8x8xf32>
      %17 = vector.broadcast %14 : vector<8x1xf32> to vector<8x8xf32>
      %18 = arith.mulf %16, %17 : vector<8x8xf32>
      %c0_11 = arith.constant 0 : index
      %c0_12 = arith.constant 0 : index
      %c0_13 = arith.constant 0 : index
      %19 = vector.load %arg6[%c0_11, %c0_12, %c0_13] : memref<1x8x32xf32, #tpu.memory_space<vmem>>, vector<1x8x8xf32>
      %20 = vector.shape_cast %19 : vector<1x8x8xf32> to vector<8x8xf32>
      %21 = vector.shape_cast %18 : vector<8x8xf32> to vector<1x8x8xf32>
      tpu.vector_store %arg6[%c0_11, %c0_12, %c0_13], %21 {strides = array<i32>} : memref<1x8x32xf32, #tpu.memory_space<vmem>>, vector<1x8x8xf32>,
      %c1 = arith.constant 1 : index
      %c0_14 = arith.constant 0 : index
      %c0_15 = arith.constant 0 : index
      %22 = vector.load %arg8[%c1, %c0_14, %c0_15] : memref<4x8x1xf32, #tpu.memory_space<vmem>>, vector<1x8x1xf32>
      %23 = vector.shape_cast %22 : vector<1x8x1xf32> to vector<8x1xf32>
      %24 = tpu.reciprocal %23 : vector<8x1xf32> -> vector<8x1xf32>
      %c1_16 = arith.constant 1 : index
      %c0_17 = arith.constant 0 : index
      %c0_18 = arith.constant 0 : index
      %25 = vector.load %arg9[%c1_16, %c0_17, %c0_18] : memref<4x8x8xf32, #tpu.memory_space<vmem>>, vector<1x8x8xf32>
      %26 = vector.shape_cast %25 : vector<1x8x8xf32> to vector<8x8xf32>
      %27 = vector.broadcast %24 : vector<8x1xf32> to vector<8x8xf32>
      %28 = arith.mulf %26, %27 : vector<8x8xf32>
      %c0_19 = arith.constant 0 : index
      %c0_20 = arith.constant 0 : index
      %c8 = arith.constant 8 : index
      %29 = vector.load %arg6[%c0_19, %c0_20, %c8] : memref<1x8x32xf32, #tpu.memory_space<vmem>>, vector<1x8x8xf32>
      %30 = vector.shape_cast %29 : vector<1x8x8xf32> to vector<8x8xf32>
      %31 = vector.shape_cast %28 : vector<8x8xf32> to vector<1x8x8xf32>
      tpu.vector_store %arg6[%c0_19, %c0_20, %c8], %31 {strides = array<i32>} : memref<1x8x32xf32, #tpu.memory_space<vmem>>, vector<1x8x8xf32>,
      %c2 = arith.constant 2 : index
      %c0_21 = arith.constant 0 : index
      %c0_22 = arith.constant 0 : index
      %32 = vector.load %arg8[%c2, %c0_21, %c0_22] : memref<4x8x1xf32, #tpu.memory_space<vmem>>, vector<1x8x1xf32>
      %33 = vector.shape_cast %32 : vector<1x8x1xf32> to vector<8x1xf32>
      %34 = tpu.reciprocal %33 : vector<8x1xf32> -> vector<8x1xf32>
      %c2_23 = arith.constant 2 : index
      %c0_24 = arith.constant 0 : index
      %c0_25 = arith.constant 0 : index
      %35 = vector.load %arg9[%c2_23, %c0_24, %c0_25] : memref<4x8x8xf32, #tpu.memory_space<vmem>>, vector<1x8x8xf32>
      %36 = vector.shape_cast %35 : vector<1x8x8xf32> to vector<8x8xf32>
      %37 = vector.broadcast %34 : vector<8x1xf32> to vector<8x8xf32>
      %38 = arith.mulf %36, %37 : vector<8x8xf32>
      %c0_26 = arith.constant 0 : index
      %c0_27 = arith.constant 0 : index
      %c16 = arith.constant 16 : index
      %39 = vector.load %arg6[%c0_26, %c0_27, %c16] : memref<1x8x32xf32, #tpu.memory_space<vmem>>, vector<1x8x8xf32>
      %40 = vector.shape_cast %39 : vector<1x8x8xf32> to vector<8x8xf32>
      %41 = vector.shape_cast %38 : vector<8x8xf32> to vector<1x8x8xf32>
      tpu.vector_store %arg6[%c0_26, %c0_27, %c16], %41 {strides = array<i32>} : memref<1x8x32xf32, #tpu.memory_space<vmem>>, vector<1x8x8xf32>,
      %c3 = arith.constant 3 : index
      %c0_28 = arith.constant 0 : index
      %c0_29 = arith.constant 0 : index
      %42 = vector.load %arg8[%c3, %c0_28, %c0_29] : memref<4x8x1xf32, #tpu.memory_space<vmem>>, vector<1x8x1xf32>
      %43 = vector.shape_cast %42 : vector<1x8x1xf32> to vector<8x1xf32>
      %44 = tpu.reciprocal %43 : vector<8x1xf32> -> vector<8x1xf32>
      %c3_30 = arith.constant 3 : index
      %c0_31 = arith.constant 0 : index
      %c0_32 = arith.constant 0 : index
      %45 = vector.load %arg9[%c3_30, %c0_31, %c0_32] : memref<4x8x8xf32, #tpu.memory_space<vmem>>, vector<1x8x8xf32>
      %46 = vector.shape_cast %45 : vector<1x8x8xf32> to vector<8x8xf32>
      %47 = vector.broadcast %44 : vector<8x1xf32> to vector<8x8xf32>
      %48 = arith.mulf %46, %47 : vector<8x8xf32>
      %c0_33 = arith.constant 0 : index
      %c0_34 = arith.constant 0 : index
      %c24 = arith.constant 24 : index
      %49 = vector.load %arg6[%c0_33, %c0_34, %c24] : memref<1x8x32xf32, #tpu.memory_space<vmem>>, vector<1x8x8xf32>
      %50 = vector.shape_cast %49 : vector<1x8x8xf32> to vector<8x8xf32>
      %51 = vector.shape_cast %48 : vector<8x8xf32> to vector<1x8x8xf32>
      tpu.vector_store %arg6[%c0_33, %c0_34, %c24], %51 {strides = array<i32>} : memref<1x8x32xf32, #tpu.memory_space<vmem>>, vector<1x8x8xf32>,
    } else {
    }
    return
  }
  func.func @transform_0(%arg0: i32, %arg1: i32, %arg2: i32) -> (i32, i32, i32) {
    %c0_i32 = arith.constant 0 : i32
    %c0_i32_0 = arith.constant 0 : i32
    return %arg0, %arg1, %c0_i32 : i32, i32, i32
  }
  func.func @transform_1(%arg0: i32, %arg1: i32, %arg2: i32) -> (i32, i32, i32) {
    %c0_i32 = arith.constant 0 : i32
    %c0_i32_0 = arith.constant 0 : i32
    return %arg0, %arg2, %c0_i32 : i32, i32, i32
  }
  func.func @transform_2(%arg0: i32, %arg1: i32, %arg2: i32) -> (i32, i32, i32) {
    %c0_i32 = arith.constant 0 : i32
    %c0_i32_0 = arith.constant 0 : i32
    return %arg0, %arg2, %c0_i32 : i32, i32, i32
  }
  func.func @transform_3(%arg0: i32, %arg1: i32, %arg2: i32) -> (i32, i32, i32) {
    %c0_i32 = arith.constant 0 : i32
    %c0_i32_0 = arith.constant 0 : i32
    return %arg0, %arg1, %c0_i32 : i32, i32, i32
  }
}

</mosaic_0001>

<llo_original>
// kernel: multi_head_attention.5
$region0: #{multi_head_attention.5}
  #allocation0 [shape = 'u32[]', space=smem, size = 0x4, offset = 0x4, fixed_abs, tag = 'smem constant byte address 0x4 - core index']
  #allocation1 [shape = 'u32[144,128]{1,0:T(1,128)}', space=vmem, size = 0x12000, scoped, tag = 'internal scratch']
  #allocation2 [shape = 'f32[16,32]{1,0:T(8,128)}', space=vmem, size = 0x2000, scoped, tag = 'scratch operand']
  %s0 = inlined_call_operand.vmem [shape: f32[16,32], index: 0, kind: input, shape index: {}]
  %s1 = inlined_call_operand.vmem [shape: f32[32,32], index: 1, kind: input, shape index: {}]
  %s2 = inlined_call_operand.hbm [shape: f32[16,32], index: 2, kind: output, shape index: {}]
  %s3 = sld [smem:[#allocation0]]
  $region26: #{multi_head_attention.5} parent=0
    _
  %s5 = ssub.s32 1, %s3
  %s6 = scalar_select 0, %s5, %s3
  $region1: #{multi_head_attention.5} parent=0
    #allocation3 [shape = 'u8[8192]{0}', space=vmem, size = 0x2000, scoped, tag = 'output window, operand 0, single buffered']
    #allocation4 [shape = 's32[1]{0}', space=sflag, size = 0x4, scoped, tag = 'scoped memory for multi_head_attention.5']
    %7 = vsyncpa [#allocation4], 0
    // Predicated region
    $region2: #{multi_head_attention.5} parent=1 // pred_check
      _
    $region3: #{multi_head_attention.5} parent=1 // pred_check_branch
      %9 = sbr.rel (0) target = $region5
    $region4: #{multi_head_attention.5} parent=1 // pred_region
      _
    $region5: #{multi_head_attention.5} parent=1 // pred_fallthru
      _
    // Predicated region
    $region6: #{multi_head_attention.5} parent=1 // pred_check
      _
    $region7: #{multi_head_attention.5} parent=1 // pred_check_branch
      %11 = sbr.rel (0) target = $region9
    $region8: #{multi_head_attention.5} parent=1 // pred_region
      _
    $region9: #{multi_head_attention.5} parent=1 // pred_fallthru
      _
    %p12 = scmp.eq.s32.totalorder 0, 0
    // Predicated region
    $region10: #{multi_head_attention.5} parent=1 // pred_check
      %p13 = pneg %p12
    $region11: #{multi_head_attention.5} parent=1 // pred_check_branch
      %15 = sbr.rel (%p13) target = $region13
    $region12: #{multi_head_attention.5} parent=1 // pred_region
      %vm16 = vcmask 261120
      %17 = vst.msk [vmem:[#allocation2] sm:$0xff] %vm16, 0.0
      %18 = vst.msk [vmem:[#allocation2 + $0x8] sm:$0xff] %vm16, 0.0
    $region13: #{multi_head_attention.5} parent=1 // pred_fallthru
      _
    %v19 = vld [vmem:[#allocation2] sm:$0xff]
    %v20 = vld [vmem:[#allocation2 + $0x8] sm:$0xff]
    %v21 = vld [vmem:[%s0] sm:$0xff]
    %v22 = vld [vmem:[%s0 + $0x8] sm:$0xff]
    %v23 = vld [vmem:[%s1] sm:$0xff]
    %v24 = vld [vmem:[%s1 + $0x8] sm:$0xff]
    %v25 = vld [vmem:[%s1 + $0x10] sm:$0xff]
    %v26 = vld [vmem:[%s1 + $0x18] sm:$0xff]
    %vm27 = vcmask 261120
    %v29 = vsel %vm27, %v21, 0
    %v32 = vsel %vm27, %v22, 0
    %34 = vmatprep.subr.mxu0 0.0
    %35 = vmatpush1.msra.mxu0 %v23
    %36 = vmatprep.subr.mxu0 0.0
    %37 = vmatpush1.msra.mxu0 %v24
    %38 = vmatprep.subr.mxu0 0.0
    %39 = vmatpush1.msra.mxu0 %v25
    %40 = vmatprep.subr.mxu0 0.0
    %41 = vmatpush1.msra.mxu0 %v26
    %42 = vmatprep.subr.mxu0 0.0
    %43 = vmatpush1.msra.mxu0 0.0
    %44 = vmatprep.subr.mxu0 0.0
    %45 = vmatpush1.msra.mxu0 0.0
    %46 = vmatprep.subr.mxu0 0.0
    %47 = vmatpush1.msra.mxu0 0.0
    %48 = vmatprep.subr.mxu0 0.0
    %49 = vmatpush1.msra.mxu0 0.0
    %50 = vmatprep.subr.mxu0 0.0
    %51 = vmatpush1.msra.mxu0 0.0
    %52 = vmatprep.subr.mxu0 0.0
    %53 = vmatpush1.msra.mxu0 0.0
    %54 = vmatprep.subr.mxu0 0.0
    %55 = vmatpush1.msra.mxu0 0.0
    %56 = vmatprep.subr.mxu0 0.0
    %57 = vmatpush1.msra.mxu0 0.0
    %58 = vmatprep.subr.mxu0 0.0
    %59 = vmatpush1.msra.mxu0 0.0
    %60 = vmatprep.subr.mxu0 0.0
    %61 = vmatpush1.msra.mxu0 0.0
    %62 = vmatprep.subr.mxu0 0.0
    %63 = vmatpush1.msra.mxu0 0.0
    %64 = vmatprep.subr.mxu0 0.0
    %65 = vmatpush1.msra.mxu0 0.0
    %66 = vmatprep.subr.mxu0 0.0
    %67 = vmatpush1.msra.mxu0 0.0
    %68 = vmatprep.subr.mxu0 0.0
    %69 = vmatpush1.msra.mxu0 0.0
    %70 = vmatprep.subr.mxu0 0.0
    %71 = vmatpush1.msra.mxu0 0.0
    %72 = vmatprep.subr.mxu0 0.0
    %73 = vmatpush1.msra.mxu0 0.0
    %74 = vmatprep.subr.mxu0 0.0
    %75 = vmatpush1.msra.mxu0 0.0
    %76 = vmatprep.subr.mxu0 0.0
    %77 = vmatpush1.msra.mxu0 0.0
    %78 = vmatprep.subr.mxu0 0.0
    %79 = vmatpush1.msra.mxu0 0.0
    %80 = vmatprep.subr.mxu0 0.0
    %81 = vmatpush1.msra.mxu0 0.0
    %82 = vmatprep.subr.mxu0 0.0
    %83 = vmatpush1.msra.mxu0 0.0
    %84 = vmatprep.subr.mxu0 0.0
    %85 = vmatpush1.msra.mxu0 0.0
    %86 = vmatprep.subr.mxu0 0.0
    %87 = vmatpush1.msra.mxu0 0.0
    %88 = vmatprep.subr.mxu0 0.0
    %89 = vmatpush1.msra.mxu0 0.0
    %90 = vmatprep.subr.mxu0 0.0
    %91 = vmatpush1.msra.mxu0 0.0
    %92 = vmatprep.subr.mxu0 0.0
    %93 = vmatpush1.msra.mxu0 0.0
    %94 = vmatprep.subr.mxu0 0.0
    %95 = vmatpush1.msra.mxu0 0.0
    %96 = vmatprep.subr.mxu0 0.0
    %97 = vmatpush1.msra.mxu0 0.0
    %98 = vmatprep.mubr.f32.mxu0 0.0
    %99 = vmatmul.mubr.f32.gmra.mrb[0].mxu0 %v29
    %v100 = vpop.f32.mrb[0].mxu0
    %v101 = vadd.f32 0.0, %v100
    %v102 = vpop.f32.mrb[0].mxu0
    %103 = vmatprep.mubr.f32.mxu0 0.0
    %104 = vmatmul.mubr.f32.gmra.mrb[0].mxu0 %v32
    %v105 = vpop.f32.mrb[0].mxu0
    %v106 = vadd.f32 0.0, %v105
    %v107 = vpop.f32.mrb[0].mxu0
    %108 = vdwg.mxu0
    %v109 = vadd.f32 %v19, %v101
    %v110 = vadd.f32 %v20, %v106
    %111 = vst.msk [vmem:[#allocation2] sm:$0xff] %vm27, %v109
    %112 = vst.msk [vmem:[#allocation2 + $0x8] sm:$0xff] %vm27, %v110
    // Predicated region
    $region14: #{multi_head_attention.5} parent=1 // pred_check
      %p113 = pneg %p12
    $region15: #{multi_head_attention.5} parent=1 // pred_check_branch
      %115 = sbr.rel (%p113) target = $region17
    $region16: #{multi_head_attention.5} parent=1 // pred_region
      %v116 = vld [vmem:[#allocation2] sm:$0xff]
      %v117 = vld [vmem:[#allocation2 + $0x8] sm:$0xff]
      %118 = vst.msk [vmem:[#allocation3] sm:$0xff] %vm27, %v116
      %119 = vst.msk [vmem:[#allocation3 + $0x8] sm:$0xff] %vm27, %v117
    $region17: #{multi_head_attention.5} parent=1 // pred_fallthru
      _
    // Predicated region
    $region18: #{multi_head_attention.5} parent=1 // pred_check
      _
    $region19: #{multi_head_attention.5} parent=1 // pred_check_branch
      %121 = sbr.rel (0) target = $region21
    $region20: #{multi_head_attention.5} parent=1 // pred_region
      %s123 = ssub.s32 256, 256
      %124 = vsyncadd [#allocation4], %s123
      %s125 = sshll.u32 [#allocation3], 4
      %s126 = int_to_ptr.vmem [resolvable:$true] %s125
      %131 = dma.vmem_to_hbm [thread:$0]  %s126, 256, %s2, [#allocation4], 128, 128, 8
    $region21: #{multi_head_attention.5} parent=1 // pred_fallthru
      _
    // Predicated region
    $region22: #{multi_head_attention.5} parent=1 // pred_check
      _
    $region23: #{multi_head_attention.5} parent=1 // pred_check_branch
      %133 = sbr.rel (0) target = $region25
    $region24: #{multi_head_attention.5} parent=1 // pred_region
      %134 = dma.done [#allocation4], 256
    $region25: #{multi_head_attention.5} parent=1 // pred_fallthru
      _
    %135 = vsyncpa [#allocation4], 1

// kernel: multi_head_attention.3
$region0: #{multi_head_attention.3}
  #allocation0 [shape = 'u32[]', space=smem, size = 0x4, offset = 0x4, fixed_abs, tag = 'smem constant byte address 0x4 - core index']
  #allocation1 [shape = 'u32[144,128]{1,0:T(1,128)}', space=vmem, size = 0x12000, scoped, tag = 'internal scratch']
  #allocation2 [shape = 'f32[16,96]{1,0:T(8,128)}', space=vmem, size = 0x2000, scoped, tag = 'scratch operand']
  %s0 = inlined_call_operand.hbm [shape: f32[16,32], index: 0, kind: input, shape index: {}]
  %s1 = inlined_call_operand.hbm [shape: f32[32,96], index: 1, kind: input, shape index: {}]
  %s2 = inlined_call_operand.vmem [shape: f32[16,96], index: 2, kind: output, shape index: {}]
  %s3 = sld [smem:[#allocation0]]
  $region34: #{multi_head_attention.3} parent=0
    _
  %s5 = ssub.s32 1, %s3
  %s6 = scalar_select 0, %s5, %s3
  $region1: #{multi_head_attention.3} parent=0
    #allocation3 [shape = 'u8[8192]{0}', space=vmem, size = 0x2000, scoped, tag = 'input window, operand 0, single buffered']
    #allocation4 [shape = 's32[1]{0}', space=sflag, size = 0x4, scoped, tag = 'scoped memory for multi_head_attention.3']
    #allocation5 [shape = 'u8[16384]{0}', space=vmem, size = 0x4000, scoped, tag = 'input window, operand 1, single buffered']
    #allocation6 [shape = 's32[1]{0}', space=sflag, size = 0x4, scoped, tag = 'scoped memory for multi_head_attention.3']
    %7 = vsyncpa [#allocation4], 0
    %8 = vsyncpa [#allocation6], 0
    // Predicated region
    $region2: #{multi_head_attention.3} parent=1 // pred_check
      _
    $region3: #{multi_head_attention.3} parent=1 // pred_check_branch
      %10 = sbr.rel (0) target = $region5
    $region4: #{multi_head_attention.3} parent=1 // pred_region
      %s12 = ssub.s32 256, 256
      %13 = vsyncadd [#allocation4], %s12
      %s14 = sshll.u32 [#allocation3], 4
      %s15 = int_to_ptr.vmem [resolvable:$true] %s14
      %20 = dma.hbm_to_vmem [thread:$0]  %s0, 256, %s15, [#allocation4], 128, 128, 8
    $region5: #{multi_head_attention.3} parent=1 // pred_fallthru
      _
    // Predicated region
    $region6: #{multi_head_attention.3} parent=1 // pred_check
      _
    $region7: #{multi_head_attention.3} parent=1 // pred_check_branch
      %22 = sbr.rel (0) target = $region9
    $region8: #{multi_head_attention.3} parent=1 // pred_region
      %s24 = ssub.s32 512, 512
      %25 = vsyncadd [#allocation6], %s24
      %s26 = sshll.u32 [#allocation5], 4
      %s27 = int_to_ptr.vmem [resolvable:$true] %s26
      %32 = dma.hbm_to_vmem [thread:$0]  %s1, 512, %s27, [#allocation6], 128, 128, 8
    $region9: #{multi_head_attention.3} parent=1 // pred_fallthru
      _
    // Predicated region
    $region10: #{multi_head_attention.3} parent=1 // pred_check
      _
    $region11: #{multi_head_attention.3} parent=1 // pred_check_branch
      %34 = sbr.rel (0) target = $region13
    $region12: #{multi_head_attention.3} parent=1 // pred_region
      %35 = dma.done [#allocation4], 256
    $region13: #{multi_head_attention.3} parent=1 // pred_fallthru
      _
    // Predicated region
    $region14: #{multi_head_attention.3} parent=1 // pred_check
      _
    $region15: #{multi_head_attention.3} parent=1 // pred_check_branch
      %37 = sbr.rel (0) target = $region17
    $region16: #{multi_head_attention.3} parent=1 // pred_region
      %38 = dma.done [#allocation6], 512
    $region17: #{multi_head_attention.3} parent=1 // pred_fallthru
      _
    %p39 = scmp.eq.s32.totalorder 0, 0
    // Predicated region
    $region18: #{multi_head_attention.3} parent=1 // pred_check
      %p40 = pneg %p39
    $region19: #{multi_head_attention.3} parent=1 // pred_check_branch
      %42 = sbr.rel (%p40) target = $region21
    $region20: #{multi_head_attention.3} parent=1 // pred_region
      %vm43 = vcmask 785408
      %44 = vst.msk [vmem:[#allocation2] sm:$0xff] %vm43, 0.0
      %45 = vst.msk [vmem:[#allocation2 + $0x8] sm:$0xff] %vm43, 0.0
    $region21: #{multi_head_attention.3} parent=1 // pred_fallthru
      _
    %v46 = vld [vmem:[#allocation2] sm:$0xff]
    %v47 = vld [vmem:[#allocation2 + $0x8] sm:$0xff]
    %v48 = vld [vmem:[#allocation3] sm:$0xff]
    %v49 = vld [vmem:[#allocation3 + $0x8] sm:$0xff]
    %v50 = vld [vmem:[#allocation5] sm:$0xff]
    %v51 = vld [vmem:[#allocation5 + $0x8] sm:$0xff]
    %v52 = vld [vmem:[#allocation5 + $0x10] sm:$0xff]
    %v53 = vld [vmem:[#allocation5 + $0x18] sm:$0xff]
    %vm54 = vcmask 261120
    %v56 = vsel %vm54, %v48, 0
    %v59 = vsel %vm54, %v49, 0
    %61 = vmatprep.subr.mxu0 0.0
    %62 = vmatpush1.msra.mxu0 %v50
    %63 = vmatprep.subr.mxu0 0.0
    %64 = vmatpush1.msra.mxu0 %v51
    %65 = vmatprep.subr.mxu0 0.0
    %66 = vmatpush1.msra.mxu0 %v52
    %67 = vmatprep.subr.mxu0 0.0
    %68 = vmatpush1.msra.mxu0 %v53
    %69 = vmatprep.subr.mxu0 0.0
    %70 = vmatpush1.msra.mxu0 0.0
    %71 = vmatprep.subr.mxu0 0.0
    %72 = vmatpush1.msra.mxu0 0.0
    %73 = vmatprep.subr.mxu0 0.0
    %74 = vmatpush1.msra.mxu0 0.0
    %75 = vmatprep.subr.mxu0 0.0
    %76 = vmatpush1.msra.mxu0 0.0
    %77 = vmatprep.subr.mxu0 0.0
    %78 = vmatpush1.msra.mxu0 0.0
    %79 = vmatprep.subr.mxu0 0.0
    %80 = vmatpush1.msra.mxu0 0.0
    %81 = vmatprep.subr.mxu0 0.0
    %82 = vmatpush1.msra.mxu0 0.0
    %83 = vmatprep.subr.mxu0 0.0
    %84 = vmatpush1.msra.mxu0 0.0
    %85 = vmatprep.subr.mxu0 0.0
    %86 = vmatpush1.msra.mxu0 0.0
    %87 = vmatprep.subr.mxu0 0.0
    %88 = vmatpush1.msra.mxu0 0.0
    %89 = vmatprep.subr.mxu0 0.0
    %90 = vmatpush1.msra.mxu0 0.0
    %91 = vmatprep.subr.mxu0 0.0
    %92 = vmatpush1.msra.mxu0 0.0
    %93 = vmatprep.subr.mxu0 0.0
    %94 = vmatpush1.msra.mxu0 0.0
    %95 = vmatprep.subr.mxu0 0.0
    %96 = vmatpush1.msra.mxu0 0.0
    %97 = vmatprep.subr.mxu0 0.0
    %98 = vmatpush1.msra.mxu0 0.0
    %99 = vmatprep.subr.mxu0 0.0
    %100 = vmatpush1.msra.mxu0 0.0
    %101 = vmatprep.subr.mxu0 0.0
    %102 = vmatpush1.msra.mxu0 0.0
    %103 = vmatprep.subr.mxu0 0.0
    %104 = vmatpush1.msra.mxu0 0.0
    %105 = vmatprep.subr.mxu0 0.0
    %106 = vmatpush1.msra.mxu0 0.0
    %107 = vmatprep.subr.mxu0 0.0
    %108 = vmatpush1.msra.mxu0 0.0
    %109 = vmatprep.subr.mxu0 0.0
    %110 = vmatpush1.msra.mxu0 0.0
    %111 = vmatprep.subr.mxu0 0.0
    %112 = vmatpush1.msra.mxu0 0.0
    %113 = vmatprep.subr.mxu0 0.0
    %114 = vmatpush1.msra.mxu0 0.0
    %115 = vmatprep.subr.mxu0 0.0
    %116 = vmatpush1.msra.mxu0 0.0
    %117 = vmatprep.subr.mxu0 0.0
    %118 = vmatpush1.msra.mxu0 0.0
    %119 = vmatprep.subr.mxu0 0.0
    %120 = vmatpush1.msra.mxu0 0.0
    %121 = vmatprep.subr.mxu0 0.0
    %122 = vmatpush1.msra.mxu0 0.0
    %123 = vmatprep.subr.mxu0 0.0
    %124 = vmatpush1.msra.mxu0 0.0
    %125 = vmatprep.mubr.f32.mxu0 0.0
    %126 = vmatmul.mubr.f32.gmra.mrb[0].mxu0 %v56
    %v127 = vpop.f32.mrb[0].mxu0
    %v128 = vadd.f32 0.0, %v127
    %v129 = vpop.f32.mrb[0].mxu0
    %130 = vmatprep.mubr.f32.mxu0 0.0
    %131 = vmatmul.mubr.f32.gmra.mrb[0].mxu0 %v59
    %v132 = vpop.f32.mrb[0].mxu0
    %v133 = vadd.f32 0.0, %v132
    %v134 = vpop.f32.mrb[0].mxu0
    %135 = vdwg.mxu0
    %v136 = vadd.f32 %v46, %v128
    %v137 = vadd.f32 %v47, %v133
    %vm138 = vcmask 785408
    %139 = vst.msk [vmem:[#allocation2] sm:$0xff] %vm138, %v136
    %140 = vst.msk [vmem:[#allocation2 + $0x8] sm:$0xff] %vm138, %v137
    // Predicated region
    $region22: #{multi_head_attention.3} parent=1 // pred_check
      %p141 = pneg %p39
    $region23: #{multi_head_attention.3} parent=1 // pred_check_branch
      %143 = sbr.rel (%p141) target = $region25
    $region24: #{multi_head_attention.3} parent=1 // pred_region
      %v144 = vld [vmem:[#allocation2] sm:$0xff]
      %v145 = vld [vmem:[#allocation2 + $0x8] sm:$0xff]
      %146 = vst.msk [vmem:[%s2] sm:$0xff] %vm138, %v144
      %147 = vst.msk [vmem:[%s2 + $0x8] sm:$0xff] %vm138, %v145
    $region25: #{multi_head_attention.3} parent=1 // pred_fallthru
      _
    // Predicated region
    $region26: #{multi_head_attention.3} parent=1 // pred_check
      _
    $region27: #{multi_head_attention.3} parent=1 // pred_check_branch
      %149 = sbr.rel (0) target = $region29
    $region28: #{multi_head_attention.3} parent=1 // pred_region
      _
    $region29: #{multi_head_attention.3} parent=1 // pred_fallthru
      _
    // Predicated region
    $region30: #{multi_head_attention.3} parent=1 // pred_check
      _
    $region31: #{multi_head_attention.3} parent=1 // pred_check_branch
      %151 = sbr.rel (0) target = $region33
    $region32: #{multi_head_attention.3} parent=1 // pred_region
      _
    $region33: #{multi_head_attention.3} parent=1 // pred_fallthru
      _
    %152 = vsyncpa [#allocation4], 1
    %153 = vsyncpa [#allocation6], 1

// kernel: multi_head_attention.4
$region0: #{multi_head_attention.4}
  #allocation0 [shape = 'u32[]', space=smem, size = 0x4, offset = 0x4, fixed_abs, tag = 'smem constant byte address 0x4 - core index']
  #allocation1 [shape = 'u32[144,128]{1,0:T(1,128)}', space=vmem, size = 0x12000, scoped, tag = 'internal scratch']
  #allocation2 [shape = 'f32[4,8,1]{2,1,0:T(8,128)}', space=vmem, size = 0x4000, scoped, tag = 'scratch operand']
  #allocation3 [shape = 'f32[4,8,1]{2,1,0:T(8,128)}', space=vmem, size = 0x4000, scoped, tag = 'scratch operand']
  #allocation4 [shape = 'f32[4,8,8]{2,1,0:T(8,128)}', space=vmem, size = 0x4000, scoped, tag = 'scratch operand']
  %s0 = inlined_call_operand.vmem [shape: f32[2,8,32], index: 0, kind: input, shape index: {}]
  %s1 = inlined_call_operand.vmem [shape: f32[2,8,32], index: 1, kind: input, shape index: {}]
  %s2 = inlined_call_operand.vmem [shape: f32[2,8,32], index: 2, kind: input, shape index: {}]
  %s3 = inlined_call_operand.vmem [shape: f32[2,8,32], index: 3, kind: output, shape index: {}]
  %s4 = sld [smem:[#allocation0]]
  $region57: #{multi_head_attention.4} parent=0
    _
  %s6 = ssub.s32 1, %s4
  %s7 = scalar_select 0, %s6, %s4
  loop: start=0, step=1, limit=4
  $region2: #{multi_head_attention.4} parent=0 // loop_pre_header
    _
  $region3: #{multi_head_attention.4} parent=0 // loop_header
    %s9 = sphi 0, %s13
    %p10 = scmp.ge.s32.totalorder %s9, 4
    %s16 = sphi 0, %s35
    %s17 = sphi 0, %s31
    %s18 = sphi 0, %s27
    %s19 = sphi 0, %s16
    %s20 = sphi 0, %s17
    %s21 = sphi 0, %s18
    %s22 = sphi 0, %s19
    %s23 = sphi 0, %s20
    %s24 = sphi 0, %s21
    %s40 = sphi 0, %s42
    %s43 = sphi 0, %s40
    %s44 = sphi 0, %s43
    %s60 = sphi 0, %s44
    %s68 = sphi 0, %s70
    %s71 = sphi 0, %s68
    %s72 = sphi 0, %s71
    %s88 = sphi 0, %s72
    %s96 = sphi 0, %s98
    %s99 = sphi 0, %s96
    %s100 = sphi 0, %s99
    %s116 = sphi 0, %s100
    %s124 = sphi 0, %s126
    %s127 = sphi 0, %s124
    %s128 = sphi 0, %s127
    %s144 = sphi 0, %s128
  $region4: #{multi_head_attention.4} parent=0 // loop_header_branch
    %12 = sbr.rel (%p10) target = $region8
  $region5: #{multi_head_attention.4} parent=0 // loop_body
    %s14 = ssub.s32 %s9, 1
    %s15 = ssub.s32 %s9, 2
    %s25 = sadd.s32 1, %s18
    %p26 = scmp.ge.s32.totalorder %s25, 1
    %s27 = scalar_select %p26, 0, %s25
    %s28 = sadd.s32 1, %s17
    %s29 = scalar_select %p26, %s28, %s17
    %p30 = scmp.ge.s32.totalorder %s29, 1
    %s31 = scalar_select %p30, 0, %s29
    %s32 = sadd.s32 1, %s16
    %s33 = scalar_select %p30, %s32, %s16
    %p34 = scmp.ge.s32.totalorder %s33, 2
    %s35 = scalar_select %p34, 0, %s33
    %s36 = ssub.s32 %s16, %s35
    %s37 = ssub.s32 %s17, %s31
    %s38 = sor.u32 %s36, %s37
    %p39 = scmp.eq.s32.totalorder %s38, 0
    %s41 = sadd.s32 %s40, 1
    %s42 = scalar_select %p39, %s40, %s41
    %p45 = pneg %p39
    %p46 = scmp.eq.s32.totalorder %s9, 1
    %p47 = por %p45, %p46
    %p48 = scmp.ne.s32.totalorder %s40, %s43
    %p49 = scmp.eq.s32.totalorder %s9, 0
    %p50 = por %p48, %p49
    %p51 = scmp.ne.s32.totalorder %s40, %s43
    %p52 = scmp.eq.s32.totalorder %s14, 1
    %p53 = por %p51, %p52
    %p54 = scmp.ne.s32.totalorder %s43, %s44
    %p55 = scmp.eq.s32.totalorder %s14, 0
    %p56 = por %p54, %p55
    %p57 = scmp.ne.s32.totalorder %s43, %s44
    %p58 = scmp.eq.s32.totalorder %s15, 1
    %p59 = por %p57, %p58
    %p61 = scmp.ne.s32.totalorder %s44, %s60
    %p62 = scmp.eq.s32.totalorder %s15, 0
    %p63 = por %p61, %p62
    %s64 = ssub.s32 %s16, %s35
    %s65 = ssub.s32 %s18, %s27
    %s66 = sor.u32 %s64, %s65
    %p67 = scmp.eq.s32.totalorder %s66, 0
    %s69 = sadd.s32 %s68, 1
    %s70 = scalar_select %p67, %s68, %s69
    %p73 = pneg %p67
    %p74 = scmp.eq.s32.totalorder %s9, 1
    %p75 = por %p73, %p74
    %p76 = scmp.ne.s32.totalorder %s68, %s71
    %p77 = scmp.eq.s32.totalorder %s9, 0
    %p78 = por %p76, %p77
    %p79 = scmp.ne.s32.totalorder %s68, %s71
    %p80 = scmp.eq.s32.totalorder %s14, 1
    %p81 = por %p79, %p80
    %p82 = scmp.ne.s32.totalorder %s71, %s72
    %p83 = scmp.eq.s32.totalorder %s14, 0
    %p84 = por %p82, %p83
    %p85 = scmp.ne.s32.totalorder %s71, %s72
    %p86 = scmp.eq.s32.totalorder %s15, 1
    %p87 = por %p85, %p86
    %p89 = scmp.ne.s32.totalorder %s72, %s88
    %p90 = scmp.eq.s32.totalorder %s15, 0
    %p91 = por %p89, %p90
    %s92 = ssub.s32 %s16, %s35
    %s93 = ssub.s32 %s18, %s27
    %s94 = sor.u32 %s92, %s93
    %p95 = scmp.eq.s32.totalorder %s94, 0
    %s97 = sadd.s32 %s96, 1
    %s98 = scalar_select %p95, %s96, %s97
    %p101 = pneg %p95
    %p102 = scmp.eq.s32.totalorder %s9, 1
    %p103 = por %p101, %p102
    %p104 = scmp.ne.s32.totalorder %s96, %s99
    %p105 = scmp.eq.s32.totalorder %s9, 0
    %p106 = por %p104, %p105
    %p107 = scmp.ne.s32.totalorder %s96, %s99
    %p108 = scmp.eq.s32.totalorder %s14, 1
    %p109 = por %p107, %p108
    %p110 = scmp.ne.s32.totalorder %s99, %s100
    %p111 = scmp.eq.s32.totalorder %s14, 0
    %p112 = por %p110, %p111
    %p113 = scmp.ne.s32.totalorder %s99, %s100
    %p114 = scmp.eq.s32.totalorder %s15, 1
    %p115 = por %p113, %p114
    %p117 = scmp.ne.s32.totalorder %s100, %s116
    %p118 = scmp.eq.s32.totalorder %s15, 0
    %p119 = por %p117, %p118
    %s120 = ssub.s32 %s16, %s35
    %s121 = ssub.s32 %s17, %s31
    %s122 = sor.u32 %s120, %s121
    %p123 = scmp.eq.s32.totalorder %s122, 0
    %s125 = sadd.s32 %s124, 1
    %s126 = scalar_select %p123, %s124, %s125
    %p129 = pneg %p123
    %p130 = scmp.eq.s32.totalorder %s9, 1
    %p131 = por %p129, %p130
    %p132 = scmp.ne.s32.totalorder %s124, %s127
    %p133 = scmp.eq.s32.totalorder %s9, 0
    %p134 = por %p132, %p133
    %p135 = scmp.ne.s32.totalorder %s124, %s127
    %p136 = scmp.eq.s32.totalorder %s14, 1
    %p137 = por %p135, %p136
    %p138 = scmp.ne.s32.totalorder %s127, %s128
    %p139 = scmp.eq.s32.totalorder %s14, 0
    %p140 = por %p138, %p139
    %p141 = scmp.ne.s32.totalorder %s127, %s128
    %p142 = scmp.eq.s32.totalorder %s15, 1
    %p143 = por %p141, %p142
    %p145 = scmp.ne.s32.totalorder %s128, %s144
    %p146 = scmp.eq.s32.totalorder %s15, 0
    %p147 = por %p145, %p146
    %p148 = scmp.le.s32.totalorder 1, %s9
    %p149 = scmp.lt.s32.totalorder %s9, 3
    %p150 = pnand %p148, %p149
    %p151 = pneg %p150
    // Predicated region
    $region9: #{multi_head_attention.4} parent=5 // pred_check
      _
    $region10: #{multi_head_attention.4} parent=5 // pred_check_branch
      %153 = sbr.rel (%p150) target = $region12
    $region11: #{multi_head_attention.4} parent=5 // pred_region
      %s154 = ssub.s32 %s9, 1
    $region12: #{multi_head_attention.4} parent=5 // pred_fallthru
      _
    %p155 = scmp.lt.s32.totalorder %s9, 2
    // Predicated region
    $region13: #{multi_head_attention.4} parent=5 // pred_check
      %p156 = pneg %p155
    $region14: #{multi_head_attention.4} parent=5 // pred_check_branch
      %158 = sbr.rel (%p156) target = $region16
    $region15: #{multi_head_attention.4} parent=5 // pred_region
      // Predicated region
      $region17: #{multi_head_attention.4} parent=15 // pred_check
        %p159 = pneg %p50
      $region18: #{multi_head_attention.4} parent=15 // pred_check_branch
        %161 = sbr.rel (%p159) target = $region20
      $region19: #{multi_head_attention.4} parent=15 // pred_region
        %p162 = scmp.lt.s32.totalorder %s16, 1
        %s163 = scalar_select %p162, %s16, 1
        %p164 = scmp.lt.s32.totalorder %s17, 0
        %s165 = scalar_select %p164, %s17, 0
        %s166 = sadd.s32 %s165, %s163
        %s167 = smul.addr %s166, 8
        %s168 = scalar_lea.vmem %s0, %s167
      $region20: #{multi_head_attention.4} parent=15 // pred_fallthru
        _
      // Predicated region
      $region21: #{multi_head_attention.4} parent=15 // pred_check
        %p169 = pneg %p78
      $region22: #{multi_head_attention.4} parent=15 // pred_check_branch
        %171 = sbr.rel (%p169) target = $region24
      $region23: #{multi_head_attention.4} parent=15 // pred_region
        %p172 = scmp.lt.s32.totalorder %s16, 1
        %s173 = scalar_select %p172, %s16, 1
        %p174 = scmp.lt.s32.totalorder %s18, 0
        %s175 = scalar_select %p174, %s18, 0
        %s176 = sadd.s32 %s175, %s173
        %s177 = smul.addr %s176, 8
        %s178 = scalar_lea.vmem %s1, %s177
      $region24: #{multi_head_attention.4} parent=15 // pred_fallthru
        _
      // Predicated region
      $region25: #{multi_head_attention.4} parent=15 // pred_check
        %p179 = pneg %p106
      $region26: #{multi_head_attention.4} parent=15 // pred_check_branch
        %181 = sbr.rel (%p179) target = $region28
      $region27: #{multi_head_attention.4} parent=15 // pred_region
        %p182 = scmp.lt.s32.totalorder %s16, 1
        %s183 = scalar_select %p182, %s16, 1
        %p184 = scmp.lt.s32.totalorder %s18, 0
        %s185 = scalar_select %p184, %s18, 0
        %s186 = sadd.s32 %s185, %s183
        %s187 = smul.addr %s186, 8
        %s188 = scalar_lea.vmem %s2, %s187
      $region28: #{multi_head_attention.4} parent=15 // pred_fallthru
        _
    $region16: #{multi_head_attention.4} parent=5 // pred_fallthru
      _
    %p189 = scmp.le.s32.totalorder 1, %s9
    %p190 = scmp.lt.s32.totalorder %s9, 3
    %p191 = pnand %p189, %p190
    %p192 = pneg %p191
    // Predicated region
    $region29: #{multi_head_attention.4} parent=5 // pred_check
      _
    $region30: #{multi_head_attention.4} parent=5 // pred_check_branch
      %194 = sbr.rel (%p191) target = $region32
    $region31: #{multi_head_attention.4} parent=5 // pred_region
      %s195 = ssub.s32 %s9, 1
      %p196 = scmp.lt.s32.totalorder %s19, 1
      %s197 = scalar_select %p196, %s19, 1
      %p198 = scmp.lt.s32.totalorder %s20, 0
      %s199 = scalar_select %p198, %s20, 0
      %s200 = sadd.s32 %s199, %s197
      %s201 = smul.addr %s200, 8
      %s202 = scalar_lea.vmem %s0, %s201
      %p203 = pneg %p56
      %p204 = pneg %p53
      %p205 = scmp.lt.s32.totalorder %s19, 1
      %s206 = scalar_select %p205, %s19, 1
      %p207 = scmp.lt.s32.totalorder %s21, 0
      %s208 = scalar_select %p207, %s21, 0
      %s209 = sadd.s32 %s208, %s206
      %s210 = smul.addr %s209, 8
      %s211 = scalar_lea.vmem %s1, %s210
      %p212 = pneg %p84
      %p213 = pneg %p81
      %p214 = scmp.lt.s32.totalorder %s19, 1
      %s215 = scalar_select %p214, %s19, 1
      %p216 = scmp.lt.s32.totalorder %s21, 0
      %s217 = scalar_select %p216, %s21, 0
      %s218 = sadd.s32 %s217, %s215
      %s219 = smul.addr %s218, 8
      %s220 = scalar_lea.vmem %s2, %s219
      %p221 = pneg %p112
      %p222 = pneg %p109
      %p223 = pneg %p140
      %p224 = pneg %p137
      %p225 = scmp.lt.s32.totalorder %s19, 1
      %s226 = scalar_select %p225, %s19, 1
      %p227 = scmp.lt.s32.totalorder %s20, 0
      %s228 = scalar_select %p227, %s20, 0
      %s229 = sadd.s32 %s228, %s226
      %s230 = smul.addr %s229, 8
      %s231 = scalar_lea.vmem %s3, %s230
      %p232 = scmp.lt.s32.totalorder %s19, 1
      %s233 = scalar_select %p232, %s19, 1
      %p234 = scmp.lt.s32.totalorder %s20, 0
      %s235 = scalar_select %p234, %s20, 0
      %s236 = sadd.s32 %s235, %s233
      %s237 = smul.addr %s236, 8
      %s238 = scalar_lea.vmem %s0, %s237
      %p239 = scmp.lt.s32.totalorder %s19, 1
      %s240 = scalar_select %p239, %s19, 1
      %p241 = scmp.lt.s32.totalorder %s21, 0
      %s242 = scalar_select %p241, %s21, 0
      %s243 = sadd.s32 %s242, %s240
      %s244 = smul.addr %s243, 8
      %s245 = scalar_lea.vmem %s1, %s244
      %p246 = scmp.lt.s32.totalorder %s19, 1
      %s247 = scalar_select %p246, %s19, 1
      %p248 = scmp.lt.s32.totalorder %s21, 0
      %s249 = scalar_select %p248, %s21, 0
      %s250 = sadd.s32 %s249, %s247
      %s251 = smul.addr %s250, 8
      %s252 = scalar_lea.vmem %s2, %s251
      %p253 = scmp.lt.s32.totalorder %s19, 1
      %s254 = scalar_select %p253, %s19, 1
      %p255 = scmp.lt.s32.totalorder %s20, 0
      %s256 = scalar_select %p255, %s20, 0
      %s257 = sadd.s32 %s256, %s254
      %s258 = smul.addr %s257, 8
      %s259 = scalar_lea.vmem %s3, %s258
      %p260 = scmp.eq.s32.totalorder %s21, 0
      // Predicated region
      $region33: #{multi_head_attention.4} parent=31 // pred_check
        %p261 = pneg %p260
      $region34: #{multi_head_attention.4} parent=31 // pred_check_branch
        %263 = sbr.rel (%p261) target = $region36
      $region35: #{multi_head_attention.4} parent=31 // pred_region
        %vm264 = vcmask 7168
        %265 = vst.msk [vmem:[#allocation2] sm:$0xff] %vm264, -inf
        %266 = vst.msk [vmem:[#allocation2 + $0x8] sm:$0xff] %vm264, -inf
        %267 = vst.msk [vmem:[#allocation2 + $0x10] sm:$0xff] %vm264, -inf
        %268 = vst.msk [vmem:[#allocation2 + $0x18] sm:$0xff] %vm264, -inf
        %269 = vst.msk [vmem:[#allocation3] sm:$0xff] %vm264, 0.0
        %270 = vst.msk [vmem:[#allocation3 + $0x8] sm:$0xff] %vm264, 0.0
        %271 = vst.msk [vmem:[#allocation3 + $0x10] sm:$0xff] %vm264, 0.0
        %272 = vst.msk [vmem:[#allocation3 + $0x18] sm:$0xff] %vm264, 0.0
        %vm273 = vcmask 64512
        %274 = vst.msk [vmem:[#allocation4] sm:$0xff] %vm273, 0.0
        %275 = vst.msk [vmem:[#allocation4 + $0x8] sm:$0xff] %vm273, 0.0
        %276 = vst.msk [vmem:[#allocation4 + $0x10] sm:$0xff] %vm273, 0.0
        %277 = vst.msk [vmem:[#allocation4 + $0x18] sm:$0xff] %vm273, 0.0
      $region36: #{multi_head_attention.4} parent=31 // pred_fallthru
        _
      %s278 = smul.u32 %s20, 8
      %s279 = smul.u32 %s21, 8
      %s280 = sadd.s32 %s278, 8
      %p281 = scmp.lt.s32.totalorder %s279, %s280
      // Predicated region
      $region37: #{multi_head_attention.4} parent=31 // pred_check
        %p282 = pneg %p281
      $region38: #{multi_head_attention.4} parent=31 // pred_check_branch
        %284 = sbr.rel (%p282) target = $region40
      $region39: #{multi_head_attention.4} parent=31 // pred_region
        %v285 = vld [vmem:[%s238] sm:$0xff]
        %v286 = vld [vmem:[%s245] sm:$0xff]
        %v287 = vld [vmem:[%s252] sm:$0xff]
        %v288 = vlaneseq
        %v289 = vshrl.u32 %v288, 7
        %v290 = vstv %s278
        %v291 = vadd.s32 %v290, %v289
        %v292 = vlaneseq
        %v293 = vand.u32 %v292, 127
        %v294 = vstv %s279
        %v295 = vadd.s32 %v294, %v293
        %vm296 = vcmp.le.s32.totalorder %v295, %v291
        %vm297 = vcmask 64512
        %v299 = vsel %vm297, %v285, 0
        %v302 = vsel %vm297, %v286, 0
        %304 = vmatprep.subr.mxu0 0.0
        %305 = vmatpush1.xpose.msra.mxu0 %v302
        %306 = vmatprep.subr.mxu0 0.0
        %307 = vmatpush1.xpose.msra.mxu0 0.0
        %308 = vmatprep.subr.mxu0 0.0
        %309 = vmatpush1.xpose.msra.mxu0 0.0
        %310 = vmatprep.subr.mxu0 0.0
        %311 = vmatpush1.xpose.msra.mxu0 0.0
        %312 = vmatprep.subr.mxu0 0.0
        %313 = vmatpush1.xpose.msra.mxu0 0.0
        %314 = vmatprep.subr.mxu0 0.0
        %315 = vmatpush1.xpose.msra.mxu0 0.0
        %316 = vmatprep.subr.mxu0 0.0
        %317 = vmatpush1.xpose.msra.mxu0 0.0
        %318 = vmatprep.subr.mxu0 0.0
        %319 = vmatpush1.xpose.msra.mxu0 0.0
        %320 = vmatprep.subr.mxu0 0.0
        %321 = vmatpush1.xpose.msra.mxu0 0.0
        %322 = vmatprep.subr.mxu0 0.0
        %323 = vmatpush1.xpose.msra.mxu0 0.0
        %324 = vmatprep.subr.mxu0 0.0
        %325 = vmatpush1.xpose.msra.mxu0 0.0
        %326 = vmatprep.subr.mxu0 0.0
        %327 = vmatpush1.xpose.msra.mxu0 0.0
        %328 = vmatprep.subr.mxu0 0.0
        %329 = vmatpush1.xpose.msra.mxu0 0.0
        %330 = vmatprep.subr.mxu0 0.0
        %331 = vmatpush1.xpose.msra.mxu0 0.0
        %332 = vmatprep.subr.mxu0 0.0
        %333 = vmatpush1.xpose.msra.mxu0 0.0
        %334 = vmatprep.subr.mxu0 0.0
        %335 = vmatpush1.xpose.msra.mxu0 0.0
        %336 = vmatprep.subr.mxu0 0.0
        %337 = vmatpush1.xpose.msra.mxu0 0.0
        %338 = vmatprep.subr.mxu0 0.0
        %339 = vmatpush1.xpose.msra.mxu0 0.0
        %340 = vmatprep.subr.mxu0 0.0
        %341 = vmatpush1.xpose.msra.mxu0 0.0
        %342 = vmatprep.subr.mxu0 0.0
        %343 = vmatpush1.xpose.msra.mxu0 0.0
        %344 = vmatprep.subr.mxu0 0.0
        %345 = vmatpush1.xpose.msra.mxu0 0.0
        %346 = vmatprep.subr.mxu0 0.0
        %347 = vmatpush1.xpose.msra.mxu0 0.0
        %348 = vmatprep.subr.mxu0 0.0
        %349 = vmatpush1.xpose.msra.mxu0 0.0
        %350 = vmatprep.subr.mxu0 0.0
        %351 = vmatpush1.xpose.msra.mxu0 0.0
        %352 = vmatprep.subr.mxu0 0.0
        %353 = vmatpush1.xpose.msra.mxu0 0.0
        %354 = vmatprep.subr.mxu0 0.0
        %355 = vmatpush1.xpose.msra.mxu0 0.0
        %356 = vmatprep.subr.mxu0 0.0
        %357 = vmatpush1.xpose.msra.mxu0 0.0
        %358 = vmatprep.subr.mxu0 0.0
        %359 = vmatpush1.xpose.msra.mxu0 0.0
        %360 = vmatprep.subr.mxu0 0.0
        %361 = vmatpush1.xpose.msra.mxu0 0.0
        %362 = vmatprep.subr.mxu0 0.0
        %363 = vmatpush1.xpose.msra.mxu0 0.0
        %364 = vmatprep.subr.mxu0 0.0
        %365 = vmatpush1.xpose.msra.mxu0 0.0
        %366 = vmatprep.subr.mxu0 0.0
        %367 = vmatpush1.xpose.msra.mxu0 0.0
        %368 = vmatprep.mubr.f32.mxu0 0.0
        %369 = vmatmul.mubr.f32.gmra.mrb[0].mxu0 %v299
        %v370 = vpop.f32.mrb[0].mxu0
        %v371 = vadd.f32 0.0, %v370
        %v372 = vpop.f32.mrb[0].mxu0
        %373 = vdwg.mxu0
        %v374 = vmul.f32 %v371, 0.35355338
        %v375 = vsel %vm296, %v374, -inf
        %v376 = vld [vmem:[#allocation2] sm:$0xff]
        %v377 = vsel %vm297, %v375, -inf
        %378 = vmax.xlane.f32.xlu0 %v377
        %v379 = vpop.xlane.xlu0 %378
        %v380 = vmax.f32 %v376, %v379
        %v381 = vsub.f32 %v376, %v380
        %v382 = vmul.f32 %v381, 1.442695
        %v383 = vpow.pop %v382
        %385 = vset.pattern.permute.xlu0 0
        %386 = vperm.xlu0 %385, %v380
        %v387 = vpop.permute.xlu0 %386
        %v389 = vsub.f32 %v375, %v387
        %v390 = vmul.f32 %v389, 1.442695
        %v391 = vpow.pop %v390
        %v392 = vld [vmem:[#allocation3] sm:$0xff]
        %v393 = vmul.f32 %v383, %v392
        %v394 = vsel %vm297, %v391, 0.0
        %395 = vadd.xlane.f32.xlu0 %v394
        %v396 = vpop.xlane.xlu0 %395
        %v397 = vadd.f32 %v393, %v396
        %vm398 = vcmask 7168
        %399 = vst.msk [vmem:[#allocation3] sm:$0xff] %vm398, %v397
        %v401 = vsel %vm297, %v391, 0
        %403 = vmatprep.subr.mxu0 0.0
        %404 = vmatpush1.msra.mxu0 %v287
        %405 = vmatprep.subr.mxu0 0.0
        %406 = vmatpush1.msra.mxu0 0.0
        %407 = vmatprep.subr.mxu0 0.0
        %408 = vmatpush1.msra.mxu0 0.0
        %409 = vmatprep.subr.mxu0 0.0
        %410 = vmatpush1.msra.mxu0 0.0
        %411 = vmatprep.subr.mxu0 0.0
        %412 = vmatpush1.msra.mxu0 0.0
        %413 = vmatprep.subr.mxu0 0.0
        %414 = vmatpush1.msra.mxu0 0.0
        %415 = vmatprep.subr.mxu0 0.0
        %416 = vmatpush1.msra.mxu0 0.0
        %417 = vmatprep.subr.mxu0 0.0
        %418 = vmatpush1.msra.mxu0 0.0
        %419 = vmatprep.subr.mxu0 0.0
        %420 = vmatpush1.msra.mxu0 0.0
        %421 = vmatprep.subr.mxu0 0.0
        %422 = vmatpush1.msra.mxu0 0.0
        %423 = vmatprep.subr.mxu0 0.0
        %424 = vmatpush1.msra.mxu0 0.0
        %425 = vmatprep.subr.mxu0 0.0
        %426 = vmatpush1.msra.mxu0 0.0
        %427 = vmatprep.subr.mxu0 0.0
        %428 = vmatpush1.msra.mxu0 0.0
        %429 = vmatprep.subr.mxu0 0.0
        %430 = vmatpush1.msra.mxu0 0.0
        %431 = vmatprep.subr.mxu0 0.0
        %432 = vmatpush1.msra.mxu0 0.0
        %433 = vmatprep.subr.mxu0 0.0
        %434 = vmatpush1.msra.mxu0 0.0
        %435 = vmatprep.subr.mxu0 0.0
        %436 = vmatpush1.msra.mxu0 0.0
        %437 = vmatprep.subr.mxu0 0.0
        %438 = vmatpush1.msra.mxu0 0.0
        %439 = vmatprep.subr.mxu0 0.0
        %440 = vmatpush1.msra.mxu0 0.0
        %441 = vmatprep.subr.mxu0 0.0
        %442 = vmatpush1.msra.mxu0 0.0
        %443 = vmatprep.subr.mxu0 0.0
        %444 = vmatpush1.msra.mxu0 0.0
        %445 = vmatprep.subr.mxu0 0.0
        %446 = vmatpush1.msra.mxu0 0.0
        %447 = vmatprep.subr.mxu0 0.0
        %448 = vmatpush1.msra.mxu0 0.0
        %449 = vmatprep.subr.mxu0 0.0
        %450 = vmatpush1.msra.mxu0 0.0
        %451 = vmatprep.subr.mxu0 0.0
        %452 = vmatpush1.msra.mxu0 0.0
        %453 = vmatprep.subr.mxu0 0.0
        %454 = vmatpush1.msra.mxu0 0.0
        %455 = vmatprep.subr.mxu0 0.0
        %456 = vmatpush1.msra.mxu0 0.0
        %457 = vmatprep.subr.mxu0 0.0
        %458 = vmatpush1.msra.mxu0 0.0
        %459 = vmatprep.subr.mxu0 0.0
        %460 = vmatpush1.msra.mxu0 0.0
        %461 = vmatprep.subr.mxu0 0.0
        %462 = vmatpush1.msra.mxu0 0.0
        %463 = vmatprep.subr.mxu0 0.0
        %464 = vmatpush1.msra.mxu0 0.0
        %465 = vmatprep.subr.mxu0 0.0
        %466 = vmatpush1.msra.mxu0 0.0
        %467 = vmatprep.mubr.f32.mxu0 0.0
        %468 = vmatmul.mubr.f32.gmra.mrb[0].mxu0 %v401
        %v469 = vpop.f32.mrb[0].mxu0
        %v470 = vadd.f32 0.0, %v469
        %v471 = vpop.f32.mrb[0].mxu0
        %472 = vdwg.mxu0
        %v473 = vld [vmem:[#allocation4] sm:$0xff]
        %475 = vset.pattern.permute.xlu0 0
        %476 = vperm.xlu0 %475, %v383
        %v477 = vpop.permute.xlu0 %476
        %v479 = vmul.f32 %v477, %v473
        %v480 = vadd.f32 %v479, %v470
        %481 = vst.msk [vmem:[#allocation4] sm:$0xff] %vm297, %v480
        %482 = vst.msk [vmem:[#allocation2] sm:$0xff] %vm398, %v380
        %483 = vrot.lane.b32.xlu0 %v285, 120
        %v484 = vpop.permute.xlu0 %483
        %485 = vrot.lane.b32.xlu0 %v286, 120
        %v486 = vpop.permute.xlu0 %485
        %v487 = vsel %vm297, %v484, 0
        %v489 = vsel %vm297, %v486, 0
        %491 = vmatprep.subr.mxu0 0.0
        %492 = vmatpush1.xpose.msra.mxu0 %v489
        %493 = vmatprep.subr.mxu0 0.0
        %494 = vmatpush1.xpose.msra.mxu0 0.0
        %495 = vmatprep.subr.mxu0 0.0
        %496 = vmatpush1.xpose.msra.mxu0 0.0
        %497 = vmatprep.subr.mxu0 0.0
        %498 = vmatpush1.xpose.msra.mxu0 0.0
        %499 = vmatprep.subr.mxu0 0.0
        %500 = vmatpush1.xpose.msra.mxu0 0.0
        %501 = vmatprep.subr.mxu0 0.0
        %502 = vmatpush1.xpose.msra.mxu0 0.0
        %503 = vmatprep.subr.mxu0 0.0
        %504 = vmatpush1.xpose.msra.mxu0 0.0
        %505 = vmatprep.subr.mxu0 0.0
        %506 = vmatpush1.xpose.msra.mxu0 0.0
        %507 = vmatprep.subr.mxu0 0.0
        %508 = vmatpush1.xpose.msra.mxu0 0.0
        %509 = vmatprep.subr.mxu0 0.0
        %510 = vmatpush1.xpose.msra.mxu0 0.0
        %511 = vmatprep.subr.mxu0 0.0
        %512 = vmatpush1.xpose.msra.mxu0 0.0
        %513 = vmatprep.subr.mxu0 0.0
        %514 = vmatpush1.xpose.msra.mxu0 0.0
        %515 = vmatprep.subr.mxu0 0.0
        %516 = vmatpush1.xpose.msra.mxu0 0.0
        %517 = vmatprep.subr.mxu0 0.0
        %518 = vmatpush1.xpose.msra.mxu0 0.0
        %519 = vmatprep.subr.mxu0 0.0
        %520 = vmatpush1.xpose.msra.mxu0 0.0
        %521 = vmatprep.subr.mxu0 0.0
        %522 = vmatpush1.xpose.msra.mxu0 0.0
        %523 = vmatprep.subr.mxu0 0.0
        %524 = vmatpush1.xpose.msra.mxu0 0.0
        %525 = vmatprep.subr.mxu0 0.0
        %526 = vmatpush1.xpose.msra.mxu0 0.0
        %527 = vmatprep.subr.mxu0 0.0
        %528 = vmatpush1.xpose.msra.mxu0 0.0
        %529 = vmatprep.subr.mxu0 0.0
        %530 = vmatpush1.xpose.msra.mxu0 0.0
        %531 = vmatprep.subr.mxu0 0.0
        %532 = vmatpush1.xpose.msra.mxu0 0.0
        %533 = vmatprep.subr.mxu0 0.0
        %534 = vmatpush1.xpose.msra.mxu0 0.0
        %535 = vmatprep.subr.mxu0 0.0
        %536 = vmatpush1.xpose.msra.mxu0 0.0
        %537 = vmatprep.subr.mxu0 0.0
        %538 = vmatpush1.xpose.msra.mxu0 0.0
        %539 = vmatprep.subr.mxu0 0.0
        %540 = vmatpush1.xpose.msra.mxu0 0.0
        %541 = vmatprep.subr.mxu0 0.0
        %542 = vmatpush1.xpose.msra.mxu0 0.0
        %543 = vmatprep.subr.mxu0 0.0
        %544 = vmatpush1.xpose.msra.mxu0 0.0
        %545 = vmatprep.subr.mxu0 0.0
        %546 = vmatpush1.xpose.msra.mxu0 0.0
        %547 = vmatprep.subr.mxu0 0.0
        %548 = vmatpush1.xpose.msra.mxu0 0.0
        %549 = vmatprep.subr.mxu0 0.0
        %550 = vmatpush1.xpose.msra.mxu0 0.0
        %551 = vmatprep.subr.mxu0 0.0
        %552 = vmatpush1.xpose.msra.mxu0 0.0
        %553 = vmatprep.subr.mxu0 0.0
        %554 = vmatpush1.xpose.msra.mxu0 0.0
        %555 = vmatprep.mubr.f32.mxu0 0.0
        %556 = vmatmul.mubr.f32.gmra.mrb[0].mxu0 %v487
        %v557 = vpop.f32.mrb[0].mxu0
        %v558 = vadd.f32 0.0, %v557
        %v559 = vpop.f32.mrb[0].mxu0
        %560 = vdwg.mxu0
        %v561 = vmul.f32 %v558, 0.35355338
        %v562 = vsel %vm296, %v561, -inf
        %s563 = scalar_lea.vmem [#allocation2], 8
        %v564 = vld [vmem:[%s563] sm:$0xff]
        %v565 = vsel %vm297, %v562, -inf
        %566 = vmax.xlane.f32.xlu0 %v565
        %v567 = vpop.xlane.xlu0 %566
        %v568 = vmax.f32 %v564, %v567
        %v569 = vsub.f32 %v564, %v568
        %v570 = vmul.f32 %v569, 1.442695
        %v571 = vpow.pop %v570
        %573 = vset.pattern.permute.xlu0 0
        %574 = vperm.xlu0 %573, %v568
        %v575 = vpop.permute.xlu0 %574
        %v577 = vsub.f32 %v562, %v575
        %v578 = vmul.f32 %v577, 1.442695
        %v579 = vpow.pop %v578
        %s580 = scalar_lea.vmem [#allocation3], 8
        %v581 = vld [vmem:[%s580] sm:$0xff]
        %v582 = vmul.f32 %v571, %v581
        %v583 = vsel %vm297, %v579, 0.0
        %584 = vadd.xlane.f32.xlu0 %v583
        %v585 = vpop.xlane.xlu0 %584
        %v586 = vadd.f32 %v582, %v585
        %587 = vst.msk [vmem:[%s580] sm:$0xff] %vm398, %v586
        %589 = vrot.lane.b32.xlu0 %v287, 120
        %v590 = vpop.permute.xlu0 %589
        %v593 = vsel %vm297, %v579, 0
        %595 = vmatprep.subr.mxu0 0.0
        %596 = vmatpush1.msra.mxu0 %v590
        %597 = vmatprep.subr.mxu0 0.0
        %598 = vmatpush1.msra.mxu0 0.0
        %599 = vmatprep.subr.mxu0 0.0
        %600 = vmatpush1.msra.mxu0 0.0
        %601 = vmatprep.subr.mxu0 0.0
        %602 = vmatpush1.msra.mxu0 0.0
        %603 = vmatprep.subr.mxu0 0.0
        %604 = vmatpush1.msra.mxu0 0.0
        %605 = vmatprep.subr.mxu0 0.0
        %606 = vmatpush1.msra.mxu0 0.0
        %607 = vmatprep.subr.mxu0 0.0
        %608 = vmatpush1.msra.mxu0 0.0
        %609 = vmatprep.subr.mxu0 0.0
        %610 = vmatpush1.msra.mxu0 0.0
        %611 = vmatprep.subr.mxu0 0.0
        %612 = vmatpush1.msra.mxu0 0.0
        %613 = vmatprep.subr.mxu0 0.0
        %614 = vmatpush1.msra.mxu0 0.0
        %615 = vmatprep.subr.mxu0 0.0
        %616 = vmatpush1.msra.mxu0 0.0
        %617 = vmatprep.subr.mxu0 0.0
        %618 = vmatpush1.msra.mxu0 0.0
        %619 = vmatprep.subr.mxu0 0.0
        %620 = vmatpush1.msra.mxu0 0.0
        %621 = vmatprep.subr.mxu0 0.0
        %622 = vmatpush1.msra.mxu0 0.0
        %623 = vmatprep.subr.mxu0 0.0
        %624 = vmatpush1.msra.mxu0 0.0
        %625 = vmatprep.subr.mxu0 0.0
        %626 = vmatpush1.msra.mxu0 0.0
        %627 = vmatprep.subr.mxu0 0.0
        %628 = vmatpush1.msra.mxu0 0.0
        %629 = vmatprep.subr.mxu0 0.0
        %630 = vmatpush1.msra.mxu0 0.0
        %631 = vmatprep.subr.mxu0 0.0
        %632 = vmatpush1.msra.mxu0 0.0
        %633 = vmatprep.subr.mxu0 0.0
        %634 = vmatpush1.msra.mxu0 0.0
        %635 = vmatprep.subr.mxu0 0.0
        %636 = vmatpush1.msra.mxu0 0.0
        %637 = vmatprep.subr.mxu0 0.0
        %638 = vmatpush1.msra.mxu0 0.0
        %639 = vmatprep.subr.mxu0 0.0
        %640 = vmatpush1.msra.mxu0 0.0
        %641 = vmatprep.subr.mxu0 0.0
        %642 = vmatpush1.msra.mxu0 0.0
        %643 = vmatprep.subr.mxu0 0.0
        %644 = vmatpush1.msra.mxu0 0.0
        %645 = vmatprep.subr.mxu0 0.0
        %646 = vmatpush1.msra.mxu0 0.0
        %647 = vmatprep.subr.mxu0 0.0
        %648 = vmatpush1.msra.mxu0 0.0
        %649 = vmatprep.subr.mxu0 0.0
        %650 = vmatpush1.msra.mxu0 0.0
        %651 = vmatprep.subr.mxu0 0.0
        %652 = vmatpush1.msra.mxu0 0.0
        %653 = vmatprep.subr.mxu0 0.0
        %654 = vmatpush1.msra.mxu0 0.0
        %655 = vmatprep.subr.mxu0 0.0
        %656 = vmatpush1.msra.mxu0 0.0
        %657 = vmatprep.subr.mxu0 0.0
        %658 = vmatpush1.msra.mxu0 0.0
        %659 = vmatprep.mubr.f32.mxu0 0.0
        %660 = vmatmul.mubr.f32.gmra.mrb[0].mxu0 %v593
        %v661 = vpop.f32.mrb[0].mxu0
        %v662 = vadd.f32 0.0, %v661
        %v663 = vpop.f32.mrb[0].mxu0
        %664 = vdwg.mxu0
        %s665 = scalar_lea.vmem [#allocation4], 8
        %v666 = vld [vmem:[%s665] sm:$0xff]
        %668 = vset.pattern.permute.xlu0 0
        %669 = vperm.xlu0 %668, %v571
        %v670 = vpop.permute.xlu0 %669
        %v672 = vmul.f32 %v670, %v666
        %v673 = vadd.f32 %v672, %v662
        %674 = vst.msk [vmem:[%s665] sm:$0xff] %vm297, %v673
        %675 = vst.msk [vmem:[%s563] sm:$0xff] %vm398, %v568
        %676 = vrot.lane.b32.xlu0 %v285, 112
        %v677 = vpop.permute.xlu0 %676
        %678 = vrot.lane.b32.xlu0 %v286, 112
        %v679 = vpop.permute.xlu0 %678
        %v680 = vsel %vm297, %v677, 0
        %v682 = vsel %vm297, %v679, 0
        %684 = vmatprep.subr.mxu0 0.0
        %685 = vmatpush1.xpose.msra.mxu0 %v682
        %686 = vmatprep.subr.mxu0 0.0
        %687 = vmatpush1.xpose.msra.mxu0 0.0
        %688 = vmatprep.subr.mxu0 0.0
        %689 = vmatpush1.xpose.msra.mxu0 0.0
        %690 = vmatprep.subr.mxu0 0.0
        %691 = vmatpush1.xpose.msra.mxu0 0.0
        %692 = vmatprep.subr.mxu0 0.0
        %693 = vmatpush1.xpose.msra.mxu0 0.0
        %694 = vmatprep.subr.mxu0 0.0
        %695 = vmatpush1.xpose.msra.mxu0 0.0
        %696 = vmatprep.subr.mxu0 0.0
        %697 = vmatpush1.xpose.msra.mxu0 0.0
        %698 = vmatprep.subr.mxu0 0.0
        %699 = vmatpush1.xpose.msra.mxu0 0.0
        %700 = vmatprep.subr.mxu0 0.0
        %701 = vmatpush1.xpose.msra.mxu0 0.0
        %702 = vmatprep.subr.mxu0 0.0
        %703 = vmatpush1.xpose.msra.mxu0 0.0
        %704 = vmatprep.subr.mxu0 0.0
        %705 = vmatpush1.xpose.msra.mxu0 0.0
        %706 = vmatprep.subr.mxu0 0.0
        %707 = vmatpush1.xpose.msra.mxu0 0.0
        %708 = vmatprep.subr.mxu0 0.0
        %709 = vmatpush1.xpose.msra.mxu0 0.0
        %710 = vmatprep.subr.mxu0 0.0
        %711 = vmatpush1.xpose.msra.mxu0 0.0
        %712 = vmatprep.subr.mxu0 0.0
        %713 = vmatpush1.xpose.msra.mxu0 0.0
        %714 = vmatprep.subr.mxu0 0.0
        %715 = vmatpush1.xpose.msra.mxu0 0.0
        %716 = vmatprep.subr.mxu0 0.0
        %717 = vmatpush1.xpose.msra.mxu0 0.0
        %718 = vmatprep.subr.mxu0 0.0
        %719 = vmatpush1.xpose.msra.mxu0 0.0
        %720 = vmatprep.subr.mxu0 0.0
        %721 = vmatpush1.xpose.msra.mxu0 0.0
        %722 = vmatprep.subr.mxu0 0.0
        %723 = vmatpush1.xpose.msra.mxu0 0.0
        %724 = vmatprep.subr.mxu0 0.0
        %725 = vmatpush1.xpose.msra.mxu0 0.0
        %726 = vmatprep.subr.mxu0 0.0
        %727 = vmatpush1.xpose.msra.mxu0 0.0
        %728 = vmatprep.subr.mxu0 0.0
        %729 = vmatpush1.xpose.msra.mxu0 0.0
        %730 = vmatprep.subr.mxu0 0.0
        %731 = vmatpush1.xpose.msra.mxu0 0.0
        %732 = vmatprep.subr.mxu0 0.0
        %733 = vmatpush1.xpose.msra.mxu0 0.0
        %734 = vmatprep.subr.mxu0 0.0
        %735 = vmatpush1.xpose.msra.mxu0 0.0
        %736 = vmatprep.subr.mxu0 0.0
        %737 = vmatpush1.xpose.msra.mxu0 0.0
        %738 = vmatprep.subr.mxu0 0.0
        %739 = vmatpush1.xpose.msra.mxu0 0.0
        %740 = vmatprep.subr.mxu0 0.0
        %741 = vmatpush1.xpose.msra.mxu0 0.0
        %742 = vmatprep.subr.mxu0 0.0
        %743 = vmatpush1.xpose.msra.mxu0 0.0
        %744 = vmatprep.subr.mxu0 0.0
        %745 = vmatpush1.xpose.msra.mxu0 0.0
        %746 = vmatprep.subr.mxu0 0.0
        %747 = vmatpush1.xpose.msra.mxu0 0.0
        %748 = vmatprep.mubr.f32.mxu0 0.0
        %749 = vmatmul.mubr.f32.gmra.mrb[0].mxu0 %v680
        %v750 = vpop.f32.mrb[0].mxu0
        %v751 = vadd.f32 0.0, %v750
        %v752 = vpop.f32.mrb[0].mxu0
        %753 = vdwg.mxu0
        %v754 = vmul.f32 %v751, 0.35355338
        %v755 = vsel %vm296, %v754, -inf
        %s756 = scalar_lea.vmem [#allocation2], 16
        %v757 = vld [vmem:[%s756] sm:$0xff]
        %v758 = vsel %vm297, %v755, -inf
        %759 = vmax.xlane.f32.xlu0 %v758
        %v760 = vpop.xlane.xlu0 %759
        %v761 = vmax.f32 %v757, %v760
        %v762 = vsub.f32 %v757, %v761
        %v763 = vmul.f32 %v762, 1.442695
        %v764 = vpow.pop %v763
        %766 = vset.pattern.permute.xlu0 0
        %767 = vperm.xlu0 %766, %v761
        %v768 = vpop.permute.xlu0 %767
        %v770 = vsub.f32 %v755, %v768
        %v771 = vmul.f32 %v770, 1.442695
        %v772 = vpow.pop %v771
        %s773 = scalar_lea.vmem [#allocation3], 16
        %v774 = vld [vmem:[%s773] sm:$0xff]
        %v775 = vmul.f32 %v764, %v774
        %v776 = vsel %vm297, %v772, 0.0
        %777 = vadd.xlane.f32.xlu0 %v776
        %v778 = vpop.xlane.xlu0 %777
        %v779 = vadd.f32 %v775, %v778
        %780 = vst.msk [vmem:[%s773] sm:$0xff] %vm398, %v779
        %781 = vrot.lane.b32.xlu0 %v287, 112
        %v782 = vpop.permute.xlu0 %781
        %v785 = vsel %vm297, %v772, 0
        %787 = vmatprep.subr.mxu0 0.0
        %788 = vmatpush1.msra.mxu0 %v782
        %789 = vmatprep.subr.mxu0 0.0
        %790 = vmatpush1.msra.mxu0 0.0
        %791 = vmatprep.subr.mxu0 0.0
        %792 = vmatpush1.msra.mxu0 0.0
        %793 = vmatprep.subr.mxu0 0.0
        %794 = vmatpush1.msra.mxu0 0.0
        %795 = vmatprep.subr.mxu0 0.0
        %796 = vmatpush1.msra.mxu0 0.0
        %797 = vmatprep.subr.mxu0 0.0
        %798 = vmatpush1.msra.mxu0 0.0
        %799 = vmatprep.subr.mxu0 0.0
        %800 = vmatpush1.msra.mxu0 0.0
        %801 = vmatprep.subr.mxu0 0.0
        %802 = vmatpush1.msra.mxu0 0.0
        %803 = vmatprep.subr.mxu0 0.0
        %804 = vmatpush1.msra.mxu0 0.0
        %805 = vmatprep.subr.mxu0 0.0
        %806 = vmatpush1.msra.mxu0 0.0
        %807 = vmatprep.subr.mxu0 0.0
        %808 = vmatpush1.msra.mxu0 0.0
        %809 = vmatprep.subr.mxu0 0.0
        %810 = vmatpush1.msra.mxu0 0.0
        %811 = vmatprep.subr.mxu0 0.0
        %812 = vmatpush1.msra.mxu0 0.0
        %813 = vmatprep.subr.mxu0 0.0
        %814 = vmatpush1.msra.mxu0 0.0
        %815 = vmatprep.subr.mxu0 0.0
        %816 = vmatpush1.msra.mxu0 0.0
        %817 = vmatprep.subr.mxu0 0.0
        %818 = vmatpush1.msra.mxu0 0.0
        %819 = vmatprep.subr.mxu0 0.0
        %820 = vmatpush1.msra.mxu0 0.0
        %821 = vmatprep.subr.mxu0 0.0
        %822 = vmatpush1.msra.mxu0 0.0
        %823 = vmatprep.subr.mxu0 0.0
        %824 = vmatpush1.msra.mxu0 0.0
        %825 = vmatprep.subr.mxu0 0.0
        %826 = vmatpush1.msra.mxu0 0.0
        %827 = vmatprep.subr.mxu0 0.0
        %828 = vmatpush1.msra.mxu0 0.0
        %829 = vmatprep.subr.mxu0 0.0
        %830 = vmatpush1.msra.mxu0 0.0
        %831 = vmatprep.subr.mxu0 0.0
        %832 = vmatpush1.msra.mxu0 0.0
        %833 = vmatprep.subr.mxu0 0.0
        %834 = vmatpush1.msra.mxu0 0.0
        %835 = vmatprep.subr.mxu0 0.0
        %836 = vmatpush1.msra.mxu0 0.0
        %837 = vmatprep.subr.mxu0 0.0
        %838 = vmatpush1.msra.mxu0 0.0
        %839 = vmatprep.subr.mxu0 0.0
        %840 = vmatpush1.msra.mxu0 0.0
        %841 = vmatprep.subr.mxu0 0.0
        %842 = vmatpush1.msra.mxu0 0.0
        %843 = vmatprep.subr.mxu0 0.0
        %844 = vmatpush1.msra.mxu0 0.0
        %845 = vmatprep.subr.mxu0 0.0
        %846 = vmatpush1.msra.mxu0 0.0
        %847 = vmatprep.subr.mxu0 0.0
        %848 = vmatpush1.msra.mxu0 0.0
        %849 = vmatprep.subr.mxu0 0.0
        %850 = vmatpush1.msra.mxu0 0.0
        %851 = vmatprep.mubr.f32.mxu0 0.0
        %852 = vmatmul.mubr.f32.gmra.mrb[0].mxu0 %v785
        %v853 = vpop.f32.mrb[0].mxu0
        %v854 = vadd.f32 0.0, %v853
        %v855 = vpop.f32.mrb[0].mxu0
        %856 = vdwg.mxu0
        %s857 = scalar_lea.vmem [#allocation4], 16
        %v858 = vld [vmem:[%s857] sm:$0xff]
        %860 = vset.pattern.permute.xlu0 0
        %861 = vperm.xlu0 %860, %v764
        %v862 = vpop.permute.xlu0 %861
        %v864 = vmul.f32 %v862, %v858
        %v865 = vadd.f32 %v864, %v854
        %866 = vst.msk [vmem:[%s857] sm:$0xff] %vm297, %v865
        %867 = vst.msk [vmem:[%s756] sm:$0xff] %vm398, %v761
        %868 = vrot.lane.b32.xlu0 %v285, 104
        %v869 = vpop.permute.xlu0 %868
        %870 = vrot.lane.b32.xlu0 %v286, 104
        %v871 = vpop.permute.xlu0 %870
        %v872 = vsel %vm297, %v869, 0
        %v874 = vsel %vm297, %v871, 0
        %876 = vmatprep.subr.mxu0 0.0
        %877 = vmatpush1.xpose.msra.mxu0 %v874
        %878 = vmatprep.subr.mxu0 0.0
        %879 = vmatpush1.xpose.msra.mxu0 0.0
        %880 = vmatprep.subr.mxu0 0.0
        %881 = vmatpush1.xpose.msra.mxu0 0.0
        %882 = vmatprep.subr.mxu0 0.0
        %883 = vmatpush1.xpose.msra.mxu0 0.0
        %884 = vmatprep.subr.mxu0 0.0
        %885 = vmatpush1.xpose.msra.mxu0 0.0
        %886 = vmatprep.subr.mxu0 0.0
        %887 = vmatpush1.xpose.msra.mxu0 0.0
        %888 = vmatprep.subr.mxu0 0.0
        %889 = vmatpush1.xpose.msra.mxu0 0.0
        %890 = vmatprep.subr.mxu0 0.0
        %891 = vmatpush1.xpose.msra.mxu0 0.0
        %892 = vmatprep.subr.mxu0 0.0
        %893 = vmatpush1.xpose.msra.mxu0 0.0
        %894 = vmatprep.subr.mxu0 0.0
        %895 = vmatpush1.xpose.msra.mxu0 0.0
        %896 = vmatprep.subr.mxu0 0.0
        %897 = vmatpush1.xpose.msra.mxu0 0.0
        %898 = vmatprep.subr.mxu0 0.0
        %899 = vmatpush1.xpose.msra.mxu0 0.0
        %900 = vmatprep.subr.mxu0 0.0
        %901 = vmatpush1.xpose.msra.mxu0 0.0
        %902 = vmatprep.subr.mxu0 0.0
        %903 = vmatpush1.xpose.msra.mxu0 0.0
        %904 = vmatprep.subr.mxu0 0.0
        %905 = vmatpush1.xpose.msra.mxu0 0.0
        %906 = vmatprep.subr.mxu0 0.0
        %907 = vmatpush1.xpose.msra.mxu0 0.0
        %908 = vmatprep.subr.mxu0 0.0
        %909 = vmatpush1.xpose.msra.mxu0 0.0
        %910 = vmatprep.subr.mxu0 0.0
        %911 = vmatpush1.xpose.msra.mxu0 0.0
        %912 = vmatprep.subr.mxu0 0.0
        %913 = vmatpush1.xpose.msra.mxu0 0.0
        %914 = vmatprep.subr.mxu0 0.0
        %915 = vmatpush1.xpose.msra.mxu0 0.0
        %916 = vmatprep.subr.mxu0 0.0
        %917 = vmatpush1.xpose.msra.mxu0 0.0
        %918 = vmatprep.subr.mxu0 0.0
        %919 = vmatpush1.xpose.msra.mxu0 0.0
        %920 = vmatprep.subr.mxu0 0.0
        %921 = vmatpush1.xpose.msra.mxu0 0.0
        %922 = vmatprep.subr.mxu0 0.0
        %923 = vmatpush1.xpose.msra.mxu0 0.0
        %924 = vmatprep.subr.mxu0 0.0
        %925 = vmatpush1.xpose.msra.mxu0 0.0
        %926 = vmatprep.subr.mxu0 0.0
        %927 = vmatpush1.xpose.msra.mxu0 0.0
        %928 = vmatprep.subr.mxu0 0.0
        %929 = vmatpush1.xpose.msra.mxu0 0.0
        %930 = vmatprep.subr.mxu0 0.0
        %931 = vmatpush1.xpose.msra.mxu0 0.0
        %932 = vmatprep.subr.mxu0 0.0
        %933 = vmatpush1.xpose.msra.mxu0 0.0
        %934 = vmatprep.subr.mxu0 0.0
        %935 = vmatpush1.xpose.msra.mxu0 0.0
        %936 = vmatprep.subr.mxu0 0.0
        %937 = vmatpush1.xpose.msra.mxu0 0.0
        %938 = vmatprep.subr.mxu0 0.0
        %939 = vmatpush1.xpose.msra.mxu0 0.0
        %940 = vmatprep.mubr.f32.mxu0 0.0
        %941 = vmatmul.mubr.f32.gmra.mrb[0].mxu0 %v872
        %v942 = vpop.f32.mrb[0].mxu0
        %v943 = vadd.f32 0.0, %v942
        %v944 = vpop.f32.mrb[0].mxu0
        %945 = vdwg.mxu0
        %v946 = vmul.f32 %v943, 0.35355338
        %v947 = vsel %vm296, %v946, -inf
        %s948 = scalar_lea.vmem [#allocation2], 24
        %v949 = vld [vmem:[%s948] sm:$0xff]
        %v950 = vsel %vm297, %v947, -inf
        %951 = vmax.xlane.f32.xlu0 %v950
        %v952 = vpop.xlane.xlu0 %951
        %v953 = vmax.f32 %v949, %v952
        %v954 = vsub.f32 %v949, %v953
        %v955 = vmul.f32 %v954, 1.442695
        %v956 = vpow.pop %v955
        %958 = vset.pattern.permute.xlu0 0
        %959 = vperm.xlu0 %958, %v953
        %v960 = vpop.permute.xlu0 %959
        %v962 = vsub.f32 %v947, %v960
        %v963 = vmul.f32 %v962, 1.442695
        %v964 = vpow.pop %v963
        %s965 = scalar_lea.vmem [#allocation3], 24
        %v966 = vld [vmem:[%s965] sm:$0xff]
        %v967 = vmul.f32 %v956, %v966
        %v968 = vsel %vm297, %v964, 0.0
        %969 = vadd.xlane.f32.xlu0 %v968
        %v970 = vpop.xlane.xlu0 %969
        %v971 = vadd.f32 %v967, %v970
        %972 = vst.msk [vmem:[%s965] sm:$0xff] %vm398, %v971
        %973 = vrot.lane.b32.xlu0 %v287, 104
        %v974 = vpop.permute.xlu0 %973
        %v977 = vsel %vm297, %v964, 0
        %979 = vmatprep.subr.mxu0 0.0
        %980 = vmatpush1.msra.mxu0 %v974
        %981 = vmatprep.subr.mxu0 0.0
        %982 = vmatpush1.msra.mxu0 0.0
        %983 = vmatprep.subr.mxu0 0.0
        %984 = vmatpush1.msra.mxu0 0.0
        %985 = vmatprep.subr.mxu0 0.0
        %986 = vmatpush1.msra.mxu0 0.0
        %987 = vmatprep.subr.mxu0 0.0
        %988 = vmatpush1.msra.mxu0 0.0
        %989 = vmatprep.subr.mxu0 0.0
        %990 = vmatpush1.msra.mxu0 0.0
        %991 = vmatprep.subr.mxu0 0.0
        %992 = vmatpush1.msra.mxu0 0.0
        %993 = vmatprep.subr.mxu0 0.0
        %994 = vmatpush1.msra.mxu0 0.0
        %995 = vmatprep.subr.mxu0 0.0
        %996 = vmatpush1.msra.mxu0 0.0
        %997 = vmatprep.subr.mxu0 0.0
        %998 = vmatpush1.msra.mxu0 0.0
        %999 = vmatprep.subr.mxu0 0.0
        %1000 = vmatpush1.msra.mxu0 0.0
        %1001 = vmatprep.subr.mxu0 0.0
        %1002 = vmatpush1.msra.mxu0 0.0
        %1003 = vmatprep.subr.mxu0 0.0
        %1004 = vmatpush1.msra.mxu0 0.0
        %1005 = vmatprep.subr.mxu0 0.0
        %1006 = vmatpush1.msra.mxu0 0.0
        %1007 = vmatprep.subr.mxu0 0.0
        %1008 = vmatpush1.msra.mxu0 0.0
        %1009 = vmatprep.subr.mxu0 0.0
        %1010 = vmatpush1.msra.mxu0 0.0
        %1011 = vmatprep.subr.mxu0 0.0
        %1012 = vmatpush1.msra.mxu0 0.0
        %1013 = vmatprep.subr.mxu0 0.0
        %1014 = vmatpush1.msra.mxu0 0.0
        %1015 = vmatprep.subr.mxu0 0.0
        %1016 = vmatpush1.msra.mxu0 0.0
        %1017 = vmatprep.subr.mxu0 0.0
        %1018 = vmatpush1.msra.mxu0 0.0
        %1019 = vmatprep.subr.mxu0 0.0
        %1020 = vmatpush1.msra.mxu0 0.0
        %1021 = vmatprep.subr.mxu0 0.0
        %1022 = vmatpush1.msra.mxu0 0.0
        %1023 = vmatprep.subr.mxu0 0.0
        %1024 = vmatpush1.msra.mxu0 0.0
        %1025 = vmatprep.subr.mxu0 0.0
        %1026 = vmatpush1.msra.mxu0 0.0
        %1027 = vmatprep.subr.mxu0 0.0
        %1028 = vmatpush1.msra.mxu0 0.0
        %1029 = vmatprep.subr.mxu0 0.0
        %1030 = vmatpush1.msra.mxu0 0.0
        %1031 = vmatprep.subr.mxu0 0.0
        %1032 = vmatpush1.msra.mxu0 0.0
        %1033 = vmatprep.subr.mxu0 0.0
        %1034 = vmatpush1.msra.mxu0 0.0
        %1035 = vmatprep.subr.mxu0 0.0
        %1036 = vmatpush1.msra.mxu0 0.0
        %1037 = vmatprep.subr.mxu0 0.0
        %1038 = vmatpush1.msra.mxu0 0.0
        %1039 = vmatprep.subr.mxu0 0.0
        %1040 = vmatpush1.msra.mxu0 0.0
        %1041 = vmatprep.subr.mxu0 0.0
        %1042 = vmatpush1.msra.mxu0 0.0
        %1043 = vmatprep.mubr.f32.mxu0 0.0
        %1044 = vmatmul.mubr.f32.gmra.mrb[0].mxu0 %v977
        %v1045 = vpop.f32.mrb[0].mxu0
        %v1046 = vadd.f32 0.0, %v1045
        %v1047 = vpop.f32.mrb[0].mxu0
        %1048 = vdwg.mxu0
        %s1049 = scalar_lea.vmem [#allocation4], 24
        %v1050 = vld [vmem:[%s1049] sm:$0xff]
        %1052 = vset.pattern.permute.xlu0 0
        %1053 = vperm.xlu0 %1052, %v956
        %v1054 = vpop.permute.xlu0 %1053
        %v1056 = vmul.f32 %v1054, %v1050
        %v1057 = vadd.f32 %v1056, %v1046
        %1058 = vst.msk [vmem:[%s1049] sm:$0xff] %vm297, %v1057
        %1059 = vst.msk [vmem:[%s948] sm:$0xff] %vm398, %v953
      $region40: #{multi_head_attention.4} parent=31 // pred_fallthru
        _
      // Predicated region
      $region41: #{multi_head_attention.4} parent=31 // pred_check
        %p1060 = pneg %p260
      $region42: #{multi_head_attention.4} parent=31 // pred_check_branch
        %1062 = sbr.rel (%p1060) target = $region44
      $region43: #{multi_head_attention.4} parent=31 // pred_region
        %v1063 = vld [vmem:[#allocation3] sm:$0xff]
        %v1064 = vrcp.pop %v1063
        %v1065 = vld [vmem:[#allocation4] sm:$0xff]
        %1067 = vset.pattern.permute.xlu0 0
        %1068 = vperm.xlu0 %1067, %v1064
        %v1069 = vpop.permute.xlu0 %1068
        %v1071 = vmul.f32 %v1065, %v1069
        %vm1072 = vcmask 64512
        %1073 = vst.msk [vmem:[%s259] sm:$0xff] %vm1072, %v1071
        %s1074 = scalar_lea.vmem [#allocation3], 8
        %v1075 = vld [vmem:[%s1074] sm:$0xff]
        %v1076 = vrcp.pop %v1075
        %s1077 = scalar_lea.vmem [#allocation4], 8
        %v1078 = vld [vmem:[%s1077] sm:$0xff]
        %1080 = vset.pattern.permute.xlu0 0
        %1081 = vperm.xlu0 %1080, %v1076
        %v1082 = vpop.permute.xlu0 %1081
        %v1084 = vmul.f32 %v1078, %v1082
        %1086 = vrot.lane.b32.xlu0 %v1084, 8
        %v1087 = vpop.permute.xlu0 %1086
        %vm1089 = vcmask 130112
        %1090 = vst.msk [vmem:[%s259] sm:$0xff] %vm1089, %v1087
        %s1091 = scalar_lea.vmem [#allocation3], 16
        %v1092 = vld [vmem:[%s1091] sm:$0xff]
        %v1093 = vrcp.pop %v1092
        %s1094 = scalar_lea.vmem [#allocation4], 16
        %v1095 = vld [vmem:[%s1094] sm:$0xff]
        %1097 = vset.pattern.permute.xlu0 0
        %1098 = vperm.xlu0 %1097, %v1093
        %v1099 = vpop.permute.xlu0 %1098
        %v1101 = vmul.f32 %v1095, %v1099
        %1103 = vrot.lane.b32.xlu0 %v1101, 16
        %v1104 = vpop.permute.xlu0 %1103
        %vm1106 = vcmask 195712
        %1107 = vst.msk [vmem:[%s259] sm:$0xff] %vm1106, %v1104
        %s1108 = scalar_lea.vmem [#allocation3], 24
        %v1109 = vld [vmem:[%s1108] sm:$0xff]
        %v1110 = vrcp.pop %v1109
        %s1111 = scalar_lea.vmem [#allocation4], 24
        %v1112 = vld [vmem:[%s1111] sm:$0xff]
        %1114 = vset.pattern.permute.xlu0 0
        %1115 = vperm.xlu0 %1114, %v1110
        %v1116 = vpop.permute.xlu0 %1115
        %v1118 = vmul.f32 %v1112, %v1116
        %1120 = vrot.lane.b32.xlu0 %v1118, 24
        %v1121 = vpop.permute.xlu0 %1120
        %vm1123 = vcmask 261312
        %1124 = vst.msk [vmem:[%s259] sm:$0xff] %vm1123, %v1121
      $region44: #{multi_head_attention.4} parent=31 // pred_fallthru
        _
      %p1125 = scmp.lt.s32.totalorder %s19, 1
      %s1126 = scalar_select %p1125, %s19, 1
      %p1127 = scmp.lt.s32.totalorder %s20, 0
      %s1128 = scalar_select %p1127, %s20, 0
      %s1129 = sadd.s32 %s1128, %s1126
      %s1130 = smul.addr %s1129, 8
      %s1131 = scalar_lea.vmem %s3, %s1130
      // Predicated region
      $region45: #{multi_head_attention.4} parent=31 // pred_check
        %p1132 = pneg %p137
      $region46: #{multi_head_attention.4} parent=31 // pred_check_branch
        %1134 = sbr.rel (%p1132) target = $region48
      $region47: #{multi_head_attention.4} parent=31 // pred_region
        _
      $region48: #{multi_head_attention.4} parent=31 // pred_fallthru
        _
    $region32: #{multi_head_attention.4} parent=5 // pred_fallthru
      _
    %p1135 = scmp.le.s32.totalorder 2, %s9
    // Predicated region
    $region49: #{multi_head_attention.4} parent=5 // pred_check
      %p1136 = pneg %p1135
    $region50: #{multi_head_attention.4} parent=5 // pred_check_branch
      %1138 = sbr.rel (%p1136) target = $region52
    $region51: #{multi_head_attention.4} parent=5 // pred_region
      %s1139 = ssub.s32 %s9, 2
      // Predicated region
      $region53: #{multi_head_attention.4} parent=51 // pred_check
        %p1140 = pneg %p143
      $region54: #{multi_head_attention.4} parent=51 // pred_check_branch
        %1142 = sbr.rel (%p1140) target = $region56
      $region55: #{multi_head_attention.4} parent=51 // pred_region
        %p1143 = scmp.lt.s32.totalorder %s22, 1
        %s1144 = scalar_select %p1143, %s22, 1
        %p1145 = scmp.lt.s32.totalorder %s23, 0
        %s1146 = scalar_select %p1145, %s23, 0
        %s1147 = sadd.s32 %s1146, %s1144
        %s1148 = smul.addr %s1147, 8
        %s1149 = scalar_lea.vmem %s3, %s1148
      $region56: #{multi_head_attention.4} parent=51 // pred_fallthru
        _
    $region52: #{multi_head_attention.4} parent=5 // pred_fallthru
      _
  $region6: #{multi_head_attention.4} parent=0 // loop_footer
    %s13 = sadd.s32 1, %s9
  $region7: #{multi_head_attention.4} parent=0 // loop_footer_branch
    %8 = sbr.rel target = $region3
  $region8: #{multi_head_attention.4} parent=0 // loop_exit
    _

</llo_original>
